<compile_context>
chip_gen: v7x
topology: tpu7x:2x2x1
jax: 0.10.0
libtpu: 0.0.40
codegen_flags: <defaults>
</compile_context>

<pallas_src>
import math
import functools

import jax
import jax.numpy as jnp
from jax import lax
from jax.experimental import pallas as pl
from jax.experimental.pallas import tpu as pltpu


def _roberta_attention_kernel(x_q_ref, x_kv_ref, mask_ref,
                              wq_ref, bq_ref,
                              wk_ref, bk_ref,
                              wv_ref, bv_ref,
                              wo_ref, bo_ref,
                              gamma_ref, beta_ref,
                              out_ref,
                              k_scr, v_scr, acc_scr,
                              *, num_heads, head_dim, eps, compute_dtype):
    qi = pl.program_id(1)

    x_q = x_q_ref[0]                               # (TQ, H) f32
    mask = mask_ref[0]                             # (1, S) additive mask (f32)
    x_q_c = x_q.astype(compute_dtype)

    # ---- K / V for the full sequence, computed once per batch (q-tile 0) ----
    @pl.when(qi == 0)
    def _():
        x_kv = x_kv_ref[0].astype(compute_dtype)   # (S, H)

        def kv_body(h, carry):
            k_h = jnp.dot(x_kv, wk_ref[h],
                          preferred_element_type=jnp.float32) + bk_ref[h]
            v_h = jnp.dot(x_kv, wv_ref[h],
                          preferred_element_type=jnp.float32) + bv_ref[h]
            k_scr[h] = k_h.astype(k_scr.dtype)     # (S, d)
            v_scr[h] = v_h.astype(v_scr.dtype)     # (S, d)
            return carry

        lax.fori_loop(0, num_heads, kv_body, 0)

    # ---- per-head attention; output projection accumulated per head ----
    acc_scr[...] = jnp.zeros_like(acc_scr)
    scale = 1.0 / math.sqrt(head_dim)

    def head_body(h, carry):
        qh = (jnp.dot(x_q_c, wq_ref[h], preferred_element_type=jnp.float32)
              + bq_ref[h]).astype(compute_dtype)                       # (TQ, d)
        kh = k_scr[h]                                                  # (S, d)

        scores = lax.dot_general(                                      # (TQ, S)
            qh, kh, (((1,), (1,)), ((), ())),
            preferred_element_type=jnp.float32) * scale
        scores = scores + mask                                         # bcast (1,S)

        m = jnp.max(scores, axis=-1, keepdims=True)
        p = jnp.exp(scores - m)
        denom = jnp.sum(p, axis=-1, keepdims=True)
        probs = (p * pl.reciprocal(denom, approx=True)).astype(compute_dtype)
        # TODO(synk): dropout(attention_probs) omitted (eval mode / p=0).

        ctx = jnp.dot(probs, v_scr[h], preferred_element_type=jnp.float32)   # (TQ, d)
        acc_scr[...] += jnp.dot(ctx.astype(compute_dtype), wo_ref[h],
                                preferred_element_type=jnp.float32)          # (TQ, H)
        return carry

    lax.fori_loop(0, num_heads, head_body, 0)

    # ---- output bias + residual + LayerNorm (RobertaSelfOutput) ----
    attn_out = acc_scr[...] + bo_ref[...]
    resid = attn_out + x_q.astype(jnp.float32)

    mean = jnp.mean(resid, axis=-1, keepdims=True)
    centered = resid - mean
    var = jnp.mean(centered * centered, axis=-1, keepdims=True)
    normed = centered * lax.rsqrt(var + eps)
    out = normed * gamma_ref[...] + beta_ref[...]

    out_ref[0] = out.astype(out_ref.dtype)


def roberta_attention(hidden_states, attention_mask, params, *,
                      num_heads, eps=1e-12, q_tile=256,
                      compute_dtype=jnp.bfloat16):
    """hidden_states: [B, S, H] f32; attention_mask: [B, S] additive (0 / -1e9)."""
    B, S, H = hidden_states.shape
    assert H % num_heads == 0
    d = H // num_heads

    tq = min(q_tile, S)
    if S % tq != 0:
        tq = S
    assert tq == S or (tq % 8 == 0 and S % tq == 0)
    n_q = S // tq

    # Head-major matmul weights: Linear stores [out, in]; we want x @ W so take
    # W.T ([in, out]) and split the output axis per head.
    wq = params["wq"].T.reshape(H, num_heads, d).transpose(1, 0, 2).astype(compute_dtype)
    wk = params["wk"].T.reshape(H, num_heads, d).transpose(1, 0, 2).astype(compute_dtype)
    wv = params["wv"].T.reshape(H, num_heads, d).transpose(1, 0, 2).astype(compute_dtype)
    # Output dense: split the *input* axis per head so ctx_h @ wo[h] accumulates.
    wo = params["wo"].T.reshape(num_heads, d, H).astype(compute_dtype)

    bq = params["bq"].reshape(num_heads, 1, d).astype(jnp.float32)
    bk = params["bk"].reshape(num_heads, 1, d).astype(jnp.float32)
    bv = params["bv"].reshape(num_heads, 1, d).astype(jnp.float32)
    bo = params["bo"].reshape(1, H).astype(jnp.float32)
    gamma = params["gamma"].reshape(1, H).astype(jnp.float32)
    beta = params["beta"].reshape(1, H).astype(jnp.float32)
    mask = attention_mask.reshape(B, 1, S).astype(jnp.float32)

    kernel = functools.partial(
        _roberta_attention_kernel,
        num_heads=num_heads, head_dim=d, eps=eps, compute_dtype=compute_dtype)

    const3d = lambda shp: pl.BlockSpec(shp, lambda b, q: (0, 0, 0))
    const2d = lambda shp: pl.BlockSpec(shp, lambda b, q: (0, 0))

    return pl.pallas_call(
        kernel,
        out_shape=jax.ShapeDtypeStruct((B, S, H), hidden_states.dtype),
        grid_spec=pltpu.PrefetchScalarGridSpec(
            num_scalar_prefetch=0,
            grid=(B, n_q),
            in_specs=[
                pl.BlockSpec((1, tq, H), lambda b, q: (b, q, 0)),   # x (query tile)
                pl.BlockSpec((1, S, H), lambda b, q: (b, 0, 0)),    # x (K/V, full seq)
                pl.BlockSpec((1, 1, S), lambda b, q: (b, 0, 0)),    # attention mask
                const3d((num_heads, H, d)), const3d((num_heads, 1, d)),  # wq, bq
                const3d((num_heads, H, d)), const3d((num_heads, 1, d)),  # wk, bk
                const3d((num_heads, H, d)), const3d((num_heads, 1, d)),  # wv, bv
                const3d((num_heads, d, H)), const2d((1, H)),             # wo, bo
                const2d((1, H)), const2d((1, H)),                        # gamma, beta
            ],
            out_specs=pl.BlockSpec((1, tq, H), lambda b, q: (b, q, 0)),
            scratch_shapes=[
                pltpu.VMEM((num_heads, S, d), compute_dtype),   # K cache (per batch)
                pltpu.VMEM((num_heads, S, d), compute_dtype),   # V cache (per batch)
                pltpu.VMEM((tq, H), jnp.float32),               # out-proj accumulator
            ],
        ),
        compiler_params=pltpu.CompilerParams(
            # q-tile axis stays "arbitrary": K/V scratch is filled at q==0 and
            # reused for the remaining q tiles of the batch.
            dimension_semantics=("parallel", "arbitrary"),
            vmem_limit_bytes=64 * 1024 * 1024),
    )(hidden_states, hidden_states, mask,
      wq, bq, wk, bk, wv, bv, wo, bo, gamma, beta)


def roberta_attention_ref(x, mask, params, *, num_heads, eps=1e-12):
    """Pure-JAX f32 reference mirroring the PyTorch module."""
    B, S, H = x.shape
    d = H // num_heads
    q = x @ params["wq"].T + params["bq"]
    k = x @ params["wk"].T + params["bk"]
    v = x @ params["wv"].T + params["bv"]
    split = lambda t: t.reshape(B, S, num_heads, d).transpose(0, 2, 1, 3)
    qh, kh, vh = split(q), split(k), split(v)
    scores = jnp.einsum("bhqd,bhkd->bhqk", qh, kh) / math.sqrt(d)
    scores = scores + mask[:, None, None, :]
    probs = jax.nn.softmax(scores, axis=-1)
    ctx = jnp.einsum("bhqk,bhkd->bhqd", probs, vh)
    ctx = ctx.transpose(0, 2, 1, 3).reshape(B, S, H)
    out = ctx @ params["wo"].T + params["bo"]
    resid = out + x
    mean = resid.mean(-1, keepdims=True)
    var = ((resid - mean) ** 2).mean(-1, keepdims=True)
    return (resid - mean) / jnp.sqrt(var + eps) * params["gamma"] + params["beta"]


if __name__ == "__main__":
    # Small config: batch=2, seq=16, hidden=32, 4 heads (head_dim=8).
    # q_tile=8 forces two query tiles per batch to exercise the K/V-cache path.
    B, S, H, NH = 2, 16, 32, 4

    key = jax.random.PRNGKey(0)
    keys = jax.random.split(key, 12)
    init = lambda k, shape, s=0.05: (s * jax.random.normal(k, shape)).astype(jnp.float32)

    params = {
        "wq": init(keys[0], (H, H)), "bq": init(keys[1], (H,)),
        "wk": init(keys[2], (H, H)), "bk": init(keys[3], (H,)),
        "wv": init(keys[4], (H, H)), "bv": init(keys[5], (H,)),
        "wo": init(keys[6], (H, H)), "bo": init(keys[7], (H,)),
        "gamma": jnp.ones((H,), jnp.float32) + init(keys[8], (H,)),
        "beta": init(keys[9], (H,)),
    }

    hidden_states = jax.random.normal(keys[10], (B, S, H), dtype=jnp.float32)
    # Additive attention mask: last 3 key positions of batch 1 are masked out.
    mask = jnp.zeros((B, S), jnp.float32).at[1, -3:].set(-1e9)

    out = roberta_attention(hidden_states, mask, params, num_heads=NH, q_tile=8)
    out = jax.block_until_ready(out)

    ref = roberta_attention_ref(hidden_states, mask, params, num_heads=NH)
    assert out.shape == (B, S, H)
    max_err = float(jnp.max(jnp.abs(out - ref)))
    # bf16 matmul operands with f32 accumulation -> loosened tolerance vs f32 ref.
    assert jnp.allclose(out, ref, rtol=2e-2, atol=2e-2), \
        f"mismatch vs JAX reference (max abs err {max_err})"

    print("KERNEL_OK")
</pallas_src>

<mosaic_0001>
module attributes {stable_mosaic.version = 11 : i64} {
  func.func @_roberta_attention_kernel(%arg0: i32, %arg1: i32, %arg2: memref<1x8x32xf32, #tpu.memory_space<vmem>>, %arg3: memref<1x16x32xf32, #tpu.memory_space<vmem>>, %arg4: memref<1x1x16xf32, #tpu.memory_space<vmem>>, %arg5: memref<4x32x8xbf16, #tpu.memory_space<vmem>>, %arg6: memref<4x1x8xf32, #tpu.memory_space<vmem>>, %arg7: memref<4x32x8xbf16, #tpu.memory_space<vmem>>, %arg8: memref<4x1x8xf32, #tpu.memory_space<vmem>>, %arg9: memref<4x32x8xbf16, #tpu.memory_space<vmem>>, %arg10: memref<4x1x8xf32, #tpu.memory_space<vmem>>, %arg11: memref<4x8x32xbf16, #tpu.memory_space<vmem>>, %arg12: memref<1x32xf32, #tpu.memory_space<vmem>>, %arg13: memref<1x32xf32, #tpu.memory_space<vmem>>, %arg14: memref<1x32xf32, #tpu.memory_space<vmem>>, %arg15: memref<1x8x32xf32, #tpu.memory_space<vmem>>, %arg16: memref<4x16x8xbf16, #tpu.memory_space<vmem>>, %arg17: memref<4x16x8xbf16, #tpu.memory_space<vmem>>, %arg18: memref<8x32xf32, #tpu.memory_space<vmem>>) attributes {dimension_semantics = [#tpu.dimension_semantics<parallel>, #tpu.dimension_semantics<arbitrary>], iteration_bounds = array<i64: 2, 2>, scalar_prefetch = 0 : i64, scratch_operands = 3 : i64, tpu.core_type = #tpu.core_type<tc>, window_params = [{transform_indices = @transform_0, window_bounds = array<i64: 1, 8, 32>}, {transform_indices = @transform_1, window_bounds = array<i64: 1, 16, 32>}, {transform_indices = @transform_2, window_bounds = array<i64: 1, 1, 16>}, {pipeline_mode = #tpu.pipeline_mode<synchronous>, transform_indices = @transform_3, window_bounds = array<i64: 4, 32, 8>}, {pipeline_mode = #tpu.pipeline_mode<synchronous>, transform_indices = @transform_4, window_bounds = array<i64: 4, 1, 8>}, {pipeline_mode = #tpu.pipeline_mode<synchronous>, transform_indices = @transform_5, window_bounds = array<i64: 4, 32, 8>}, {pipeline_mode = #tpu.pipeline_mode<synchronous>, transform_indices = @transform_6, window_bounds = array<i64: 4, 1, 8>}, {pipeline_mode = #tpu.pipeline_mode<synchronous>, transform_indices = @transform_7, window_bounds = array<i64: 4, 32, 8>}, {pipeline_mode = #tpu.pipeline_mode<synchronous>, transform_indices = @transform_8, window_bounds = array<i64: 4, 1, 8>}, {pipeline_mode = #tpu.pipeline_mode<synchronous>, transform_indices = @transform_9, window_bounds = array<i64: 4, 8, 32>}, {pipeline_mode = #tpu.pipeline_mode<synchronous>, transform_indices = @transform_10, window_bounds = array<i64: 1, 32>}, {pipeline_mode = #tpu.pipeline_mode<synchronous>, transform_indices = @transform_11, window_bounds = array<i64: 1, 32>}, {pipeline_mode = #tpu.pipeline_mode<synchronous>, transform_indices = @transform_12, window_bounds = array<i64: 1, 32>}, {transform_indices = @transform_13, window_bounds = array<i64: 1, 8, 32>}]} {
    %c0 = arith.constant 0 : index
    %c0_0 = arith.constant 0 : index
    %c0_1 = arith.constant 0 : index
    %0 = vector.load %arg2[%c0, %c0_0, %c0_1] : memref<1x8x32xf32, #tpu.memory_space<vmem>>, vector<1x8x32xf32>
    %1 = vector.shape_cast %0 : vector<1x8x32xf32> to vector<8x32xf32>
    %c0_2 = arith.constant 0 : index
    %c0_3 = arith.constant 0 : index
    %c0_4 = arith.constant 0 : index
    %2 = vector.load %arg4[%c0_2, %c0_3, %c0_4] : memref<1x1x16xf32, #tpu.memory_space<vmem>>, vector<1x1x16xf32>
    %3 = vector.shape_cast %2 : vector<1x1x16xf32> to vector<1x16xf32>
    %4 = arith.truncf %1 : vector<8x32xf32> to vector<8x32xbf16>
    %c0_i32 = arith.constant 0 : i32
    %5 = arith.cmpi eq, %arg1, %c0_i32 : i32
    %6 = arith.extui %5 : i1 to i32
    %c0_i32_5 = arith.constant 0 : i32
    %7 = arith.cmpi ne, %6, %c0_i32_5 : i32
    scf.if %7 {
      %c0_26 = arith.constant 0 : index
      %c0_27 = arith.constant 0 : index
      %c0_28 = arith.constant 0 : index
      %41 = vector.load %arg3[%c0_26, %c0_27, %c0_28] : memref<1x16x32xf32, #tpu.memory_space<vmem>>, vector<1x16x32xf32>
      %42 = vector.shape_cast %41 : vector<1x16x32xf32> to vector<16x32xf32>
      %43 = arith.truncf %42 : vector<16x32xf32> to vector<16x32xbf16>
      %c0_i32_29 = arith.constant 0 : i32
      %c4_i32_30 = arith.constant 4 : i32
      %44 = arith.addi %c0_i32_29, %c4_i32_30 : i32
      %c1_i32_31 = arith.constant 1 : i32
      scf.for %arg19 = %c0_i32_29 to %44 step %c1_i32_31  : i32 {
        %45 = arith.index_cast %arg19 : i32 to index
        %c0_33 = arith.constant 0 : index
        %c0_34 = arith.constant 0 : index
        %46 = vector.load %arg7[%45, %c0_33, %c0_34] : memref<4x32x8xbf16, #tpu.memory_space<vmem>>, vector<1x32x8xbf16>
        %47 = vector.shape_cast %46 : vector<1x32x8xbf16> to vector<32x8xbf16>
        %cst_35 = arith.constant dense<0.000000e+00> : vector<16x8xf32>
        %48 = tpu.matmul %43, %47, %cst_35 {dimension_numbers = #tpu.dot_dimension_numbers<[1], [0], [0], [1], [0, 0, 1, 1], [], []>} : vector<16x32xbf16>, vector<32x8xbf16>, vector<16x8xf32> -> vector<16x8xf32>
        %49 = arith.index_cast %arg19 : i32 to index
        %c0_36 = arith.constant 0 : index
        %c0_37 = arith.constant 0 : index
        %50 = vector.load %arg8[%49, %c0_36, %c0_37] : memref<4x1x8xf32, #tpu.memory_space<vmem>>, vector<1x1x8xf32>
        %51 = vector.shape_cast %50 : vector<1x1x8xf32> to vector<1x8xf32>
        %52 = vector.broadcast %51 : vector<1x8xf32> to vector<16x8xf32>
        %53 = arith.addf %48, %52 : vector<16x8xf32>
        %54 = arith.index_cast %arg19 : i32 to index
        %c0_38 = arith.constant 0 : index
        %c0_39 = arith.constant 0 : index
        %55 = vector.load %arg9[%54, %c0_38, %c0_39] : memref<4x32x8xbf16, #tpu.memory_space<vmem>>, vector<1x32x8xbf16>
        %56 = vector.shape_cast %55 : vector<1x32x8xbf16> to vector<32x8xbf16>
        %cst_40 = arith.constant dense<0.000000e+00> : vector<16x8xf32>
        %57 = tpu.matmul %43, %56, %cst_40 {dimension_numbers = #tpu.dot_dimension_numbers<[1], [0], [0], [1], [0, 0, 1, 1], [], []>} : vector<16x32xbf16>, vector<32x8xbf16>, vector<16x8xf32> -> vector<16x8xf32>
        %58 = arith.index_cast %arg19 : i32 to index
        %c0_41 = arith.constant 0 : index
        %c0_42 = arith.constant 0 : index
        %59 = vector.load %arg10[%58, %c0_41, %c0_42] : memref<4x1x8xf32, #tpu.memory_space<vmem>>, vector<1x1x8xf32>
        %60 = vector.shape_cast %59 : vector<1x1x8xf32> to vector<1x8xf32>
        %61 = vector.broadcast %60 : vector<1x8xf32> to vector<16x8xf32>
        %62 = arith.addf %57, %61 : vector<16x8xf32>
        %63 = arith.truncf %53 : vector<16x8xf32> to vector<16x8xbf16>
        %64 = arith.index_cast %arg19 : i32 to index
        %c0_43 = arith.constant 0 : index
        %c0_44 = arith.constant 0 : index
        %65 = vector.load %arg16[%64, %c0_43, %c0_44] : memref<4x16x8xbf16, #tpu.memory_space<vmem>>, vector<1x16x8xbf16>
        %66 = vector.shape_cast %65 : vector<1x16x8xbf16> to vector<16x8xbf16>
        %67 = vector.shape_cast %63 : vector<16x8xbf16> to vector<1x16x8xbf16>
        tpu.vector_store %arg16[%64, %c0_43, %c0_44], %67 {strides = array<i32>} : memref<4x16x8xbf16, #tpu.memory_space<vmem>>, vector<1x16x8xbf16>,
        %68 = arith.truncf %62 : vector<16x8xf32> to vector<16x8xbf16>
        %69 = arith.index_cast %arg19 : i32 to index
        %c0_45 = arith.constant 0 : index
        %c0_46 = arith.constant 0 : index
        %70 = vector.load %arg17[%69, %c0_45, %c0_46] : memref<4x16x8xbf16, #tpu.memory_space<vmem>>, vector<1x16x8xbf16>
        %71 = vector.shape_cast %70 : vector<1x16x8xbf16> to vector<16x8xbf16>
        %72 = vector.shape_cast %68 : vector<16x8xbf16> to vector<1x16x8xbf16>
        tpu.vector_store %arg17[%69, %c0_45, %c0_46], %72 {strides = array<i32>} : memref<4x16x8xbf16, #tpu.memory_space<vmem>>, vector<1x16x8xbf16>,
      }
      %c4_i32_32 = arith.constant 4 : i32
    } else {
    }
    %cst = arith.constant 0.000000e+00 : f32
    %8 = vector.broadcast %cst : f32 to vector<8x32xf32>
    %c0_6 = arith.constant 0 : index
    %c0_7 = arith.constant 0 : index
    %9 = vector.load %arg18[%c0_6, %c0_7] : memref<8x32xf32, #tpu.memory_space<vmem>>, vector<8x32xf32>
    tpu.vector_store %arg18[%c0_6, %c0_7], %8 {strides = array<i32>} : memref<8x32xf32, #tpu.memory_space<vmem>>, vector<8x32xf32>,
    %c0_i32_8 = arith.constant 0 : i32
    %c4_i32 = arith.constant 4 : i32
    %10 = arith.addi %c0_i32_8, %c4_i32 : i32
    %c1_i32 = arith.constant 1 : i32
    scf.for %arg19 = %c0_i32_8 to %10 step %c1_i32  : i32 {
      %41 = arith.index_cast %arg19 : i32 to index
      %c0_26 = arith.constant 0 : index
      %c0_27 = arith.constant 0 : index
      %42 = vector.load %arg5[%41, %c0_26, %c0_27] : memref<4x32x8xbf16, #tpu.memory_space<vmem>>, vector<1x32x8xbf16>
      %43 = vector.shape_cast %42 : vector<1x32x8xbf16> to vector<32x8xbf16>
      %cst_28 = arith.constant dense<0.000000e+00> : vector<8x8xf32>
      %44 = tpu.matmul %4, %43, %cst_28 {dimension_numbers = #tpu.dot_dimension_numbers<[1], [0], [0], [1], [0, 0, 1, 1], [], []>} : vector<8x32xbf16>, vector<32x8xbf16>, vector<8x8xf32> -> vector<8x8xf32>
      %45 = arith.index_cast %arg19 : i32 to index
      %c0_29 = arith.constant 0 : index
      %c0_30 = arith.constant 0 : index
      %46 = vector.load %arg6[%45, %c0_29, %c0_30] : memref<4x1x8xf32, #tpu.memory_space<vmem>>, vector<1x1x8xf32>
      %47 = vector.shape_cast %46 : vector<1x1x8xf32> to vector<1x8xf32>
      %48 = vector.broadcast %47 : vector<1x8xf32> to vector<8x8xf32>
      %49 = arith.addf %44, %48 : vector<8x8xf32>
      %50 = arith.truncf %49 : vector<8x8xf32> to vector<8x8xbf16>
      %51 = arith.index_cast %arg19 : i32 to index
      %c0_31 = arith.constant 0 : index
      %c0_32 = arith.constant 0 : index
      %52 = vector.load %arg16[%51, %c0_31, %c0_32] : memref<4x16x8xbf16, #tpu.memory_space<vmem>>, vector<1x16x8xbf16>
      %53 = vector.shape_cast %52 : vector<1x16x8xbf16> to vector<16x8xbf16>
      %cst_33 = arith.constant dense<0.000000e+00> : vector<8x16xf32>
      %54 = tpu.matmul %50, %53, %cst_33 {dimension_numbers = #tpu.dot_dimension_numbers<[1], [1], [0], [0], [0, 0, 1, 0], [], []>} : vector<8x8xbf16>, vector<16x8xbf16>, vector<8x16xf32> -> vector<8x16xf32>
      %cst_34 = arith.constant 0.353553385 : f32
      %55 = vector.broadcast %cst_34 : f32 to vector<8x16xf32>
      %56 = arith.mulf %54, %55 : vector<8x16xf32>
      %57 = vector.broadcast %3 : vector<1x16xf32> to vector<8x16xf32>
      %58 = arith.addf %56, %57 : vector<8x16xf32>
      %cst_35 = arith.constant dense<0xFF800000> : vector<8xf32>
      %59 = vector.multi_reduction <maximumf>, %58, %cst_35 [1] : vector<8x16xf32> to vector<8xf32>
      %60 = vector.shape_cast %59 : vector<8xf32> to vector<8x1xf32>
      %61 = vector.broadcast %60 : vector<8x1xf32> to vector<8x16xf32>
      %62 = arith.subf %58, %61 : vector<8x16xf32>
      %63 = math.exp %62 : vector<8x16xf32>
      %cst_36 = arith.constant dense<0.000000e+00> : vector<8xf32>
      %64 = vector.multi_reduction <add>, %63, %cst_36 [1] : vector<8x16xf32> to vector<8xf32>
      %65 = vector.shape_cast %64 : vector<8xf32> to vector<8x1xf32>
      %66 = tpu.reciprocal %65 {approx = true} : vector<8x1xf32> -> vector<8x1xf32>
      %67 = vector.broadcast %66 : vector<8x1xf32> to vector<8x16xf32>
      %68 = arith.mulf %63, %67 : vector<8x16xf32>
      %69 = arith.truncf %68 : vector<8x16xf32> to vector<8x16xbf16>
      %70 = arith.index_cast %arg19 : i32 to index
      %c0_37 = arith.constant 0 : index
      %c0_38 = arith.constant 0 : index
      %71 = vector.load %arg17[%70, %c0_37, %c0_38] : memref<4x16x8xbf16, #tpu.memory_space<vmem>>, vector<1x16x8xbf16>
      %72 = vector.shape_cast %71 : vector<1x16x8xbf16> to vector<16x8xbf16>
      %cst_39 = arith.constant dense<0.000000e+00> : vector<8x8xf32>
      %73 = tpu.matmul %69, %72, %cst_39 {dimension_numbers = #tpu.dot_dimension_numbers<[1], [0], [0], [1], [0, 0, 1, 1], [], []>} : vector<8x16xbf16>, vector<16x8xbf16>, vector<8x8xf32> -> vector<8x8xf32>
      %c0_40 = arith.constant 0 : index
      %c0_41 = arith.constant 0 : index
      %74 = vector.load %arg18[%c0_40, %c0_41] : memref<8x32xf32, #tpu.memory_space<vmem>>, vector<8x32xf32>
      %75 = arith.truncf %73 : vector<8x8xf32> to vector<8x8xbf16>
      %76 = arith.index_cast %arg19 : i32 to index
      %c0_42 = arith.constant 0 : index
      %c0_43 = arith.constant 0 : index
      %77 = vector.load %arg11[%76, %c0_42, %c0_43] : memref<4x8x32xbf16, #tpu.memory_space<vmem>>, vector<1x8x32xbf16>
      %78 = vector.shape_cast %77 : vector<1x8x32xbf16> to vector<8x32xbf16>
      %cst_44 = arith.constant dense<0.000000e+00> : vector<8x32xf32>
      %79 = tpu.matmul %75, %78, %cst_44 {dimension_numbers = #tpu.dot_dimension_numbers<[1], [0], [0], [1], [0, 0, 1, 1], [], []>} : vector<8x8xbf16>, vector<8x32xbf16>, vector<8x32xf32> -> vector<8x32xf32>
      %80 = arith.addf %74, %79 : vector<8x32xf32>
      %c0_45 = arith.constant 0 : index
      %c0_46 = arith.constant 0 : index
      %81 = vector.load %arg18[%c0_45, %c0_46] : memref<8x32xf32, #tpu.memory_space<vmem>>, vector<8x32xf32>
      tpu.vector_store %arg18[%c0_45, %c0_46], %80 {strides = array<i32>} : memref<8x32xf32, #tpu.memory_space<vmem>>, vector<8x32xf32>,
    }
    %c4_i32_9 = arith.constant 4 : i32
    %c0_10 = arith.constant 0 : index
    %c0_11 = arith.constant 0 : index
    %11 = vector.load %arg18[%c0_10, %c0_11] : memref<8x32xf32, #tpu.memory_space<vmem>>, vector<8x32xf32>
    %c0_12 = arith.constant 0 : index
    %c0_13 = arith.constant 0 : index
    %12 = vector.load %arg12[%c0_12, %c0_13] : memref<1x32xf32, #tpu.memory_space<vmem>>, vector<1x32xf32>
    %13 = vector.broadcast %12 : vector<1x32xf32> to vector<8x32xf32>
    %14 = arith.addf %11, %13 : vector<8x32xf32>
    %15 = arith.addf %14, %1 : vector<8x32xf32>
    %cst_14 = arith.constant dense<0.000000e+00> : vector<8xf32>
    %16 = vector.multi_reduction <add>, %15, %cst_14 [1] : vector<8x32xf32> to vector<8xf32>
    %17 = vector.shape_cast %16 : vector<8xf32> to vector<8x1xf32>
    %cst_15 = arith.constant 3.200000e+01 : f32
    %18 = vector.broadcast %cst_15 : f32 to vector<8x1xf32>
    %19 = arith.divf %17, %18 : vector<8x1xf32>
    %20 = vector.broadcast %19 : vector<8x1xf32> to vector<8x32xf32>
    %21 = arith.subf %15, %20 : vector<8x32xf32>
    %22 = arith.mulf %21, %21 : vector<8x32xf32>
    %cst_16 = arith.constant dense<0.000000e+00> : vector<8xf32>
    %23 = vector.multi_reduction <add>, %22, %cst_16 [1] : vector<8x32xf32> to vector<8xf32>
    %24 = vector.shape_cast %23 : vector<8xf32> to vector<8x1xf32>
    %cst_17 = arith.constant 3.200000e+01 : f32
    %25 = vector.broadcast %cst_17 : f32 to vector<8x1xf32>
    %26 = arith.divf %24, %25 : vector<8x1xf32>
    %cst_18 = arith.constant 9.99999996E-13 : f32
    %27 = vector.broadcast %cst_18 : f32 to vector<8x1xf32>
    %28 = arith.addf %26, %27 : vector<8x1xf32>
    %29 = math.rsqrt %28 : vector<8x1xf32>
    %30 = vector.broadcast %29 : vector<8x1xf32> to vector<8x32xf32>
    %31 = arith.mulf %21, %30 : vector<8x32xf32>
    %c0_19 = arith.constant 0 : index
    %c0_20 = arith.constant 0 : index
    %32 = vector.load %arg13[%c0_19, %c0_20] : memref<1x32xf32, #tpu.memory_space<vmem>>, vector<1x32xf32>
    %33 = vector.broadcast %32 : vector<1x32xf32> to vector<8x32xf32>
    %34 = arith.mulf %31, %33 : vector<8x32xf32>
    %c0_21 = arith.constant 0 : index
    %c0_22 = arith.constant 0 : index
    %35 = vector.load %arg14[%c0_21, %c0_22] : memref<1x32xf32, #tpu.memory_space<vmem>>, vector<1x32xf32>
    %36 = vector.broadcast %35 : vector<1x32xf32> to vector<8x32xf32>
    %37 = arith.addf %34, %36 : vector<8x32xf32>
    %c0_23 = arith.constant 0 : index
    %c0_24 = arith.constant 0 : index
    %c0_25 = arith.constant 0 : index
    %38 = vector.load %arg15[%c0_23, %c0_24, %c0_25] : memref<1x8x32xf32, #tpu.memory_space<vmem>>, vector<1x8x32xf32>
    %39 = vector.shape_cast %38 : vector<1x8x32xf32> to vector<8x32xf32>
    %40 = vector.shape_cast %37 : vector<8x32xf32> to vector<1x8x32xf32>
    tpu.vector_store %arg15[%c0_23, %c0_24, %c0_25], %40 {strides = array<i32>} : memref<1x8x32xf32, #tpu.memory_space<vmem>>, vector<1x8x32xf32>,
    return
  }
  func.func @transform_0(%arg0: i32, %arg1: i32) -> (i32, i32, i32) {
    %c0_i32 = arith.constant 0 : i32
    %c0_i32_0 = arith.constant 0 : i32
    return %arg0, %arg1, %c0_i32 : i32, i32, i32
  }
  func.func @transform_1(%arg0: i32, %arg1: i32) -> (i32, i32, i32) {
    %c0_i32 = arith.constant 0 : i32
    %c0_i32_0 = arith.constant 0 : i32
    %c0_i32_1 = arith.constant 0 : i32
    return %arg0, %c0_i32, %c0_i32_0 : i32, i32, i32
  }
  func.func @transform_2(%arg0: i32, %arg1: i32) -> (i32, i32, i32) {
    %c0_i32 = arith.constant 0 : i32
    %c0_i32_0 = arith.constant 0 : i32
    %c0_i32_1 = arith.constant 0 : i32
    return %arg0, %c0_i32, %c0_i32_0 : i32, i32, i32
  }
  func.func @transform_3(%arg0: i32, %arg1: i32) -> (i32, i32, i32) {
    %c0_i32 = arith.constant 0 : i32
    %c0_i32_0 = arith.constant 0 : i32
    %c0_i32_1 = arith.constant 0 : i32
    %c0_i32_2 = arith.constant 0 : i32
    return %c0_i32, %c0_i32_0, %c0_i32_1 : i32, i32, i32
  }
  func.func @transform_4(%arg0: i32, %arg1: i32) -> (i32, i32, i32) {
    %c0_i32 = arith.constant 0 : i32
    %c0_i32_0 = arith.constant 0 : i32
    %c0_i32_1 = arith.constant 0 : i32
    %c0_i32_2 = arith.constant 0 : i32
    return %c0_i32, %c0_i32_0, %c0_i32_1 : i32, i32, i32
  }
  func.func @transform_5(%arg0: i32, %arg1: i32) -> (i32, i32, i32) {
    %c0_i32 = arith.constant 0 : i32
    %c0_i32_0 = arith.constant 0 : i32
    %c0_i32_1 = arith.constant 0 : i32
    %c0_i32_2 = arith.constant 0 : i32
    return %c0_i32, %c0_i32_0, %c0_i32_1 : i32, i32, i32
  }
  func.func @transform_6(%arg0: i32, %arg1: i32) -> (i32, i32, i32) {
    %c0_i32 = arith.constant 0 : i32
    %c0_i32_0 = arith.constant 0 : i32
    %c0_i32_1 = arith.constant 0 : i32
    %c0_i32_2 = arith.constant 0 : i32
    return %c0_i32, %c0_i32_0, %c0_i32_1 : i32, i32, i32
  }
  func.func @transform_7(%arg0: i32, %arg1: i32) -> (i32, i32, i32) {
    %c0_i32 = arith.constant 0 : i32
    %c0_i32_0 = arith.constant 0 : i32
    %c0_i32_1 = arith.constant 0 : i32
    %c0_i32_2 = arith.constant 0 : i32
    return %c0_i32, %c0_i32_0, %c0_i32_1 : i32, i32, i32
  }
  func.func @transform_8(%arg0: i32, %arg1: i32) -> (i32, i32, i32) {
    %c0_i32 = arith.constant 0 : i32
    %c0_i32_0 = arith.constant 0 : i32
    %c0_i32_1 = arith.constant 0 : i32
    %c0_i32_2 = arith.constant 0 : i32
    return %c0_i32, %c0_i32_0, %c0_i32_1 : i32, i32, i32
  }
  func.func @transform_9(%arg0: i32, %arg1: i32) -> (i32, i32, i32) {
    %c0_i32 = arith.constant 0 : i32
    %c0_i32_0 = arith.constant 0 : i32
    %c0_i32_1 = arith.constant 0 : i32
    %c0_i32_2 = arith.constant 0 : i32
    return %c0_i32, %c0_i32_0, %c0_i32_1 : i32, i32, i32
  }
  func.func @transform_10(%arg0: i32, %arg1: i32) -> (i32, i32) {
    %c0_i32 = arith.constant 0 : i32
    %c0_i32_0 = arith.constant 0 : i32
    %c0_i32_1 = arith.constant 0 : i32
    return %c0_i32, %c0_i32_0 : i32, i32
  }
  func.func @transform_11(%arg0: i32, %arg1: i32) -> (i32, i32) {
    %c0_i32 = arith.constant 0 : i32
    %c0_i32_0 = arith.constant 0 : i32
    %c0_i32_1 = arith.constant 0 : i32
    return %c0_i32, %c0_i32_0 : i32, i32
  }
  func.func @transform_12(%arg0: i32, %arg1: i32) -> (i32, i32) {
    %c0_i32 = arith.constant 0 : i32
    %c0_i32_0 = arith.constant 0 : i32
    %c0_i32_1 = arith.constant 0 : i32
    return %c0_i32, %c0_i32_0 : i32, i32
  }
  func.func @transform_13(%arg0: i32, %arg1: i32) -> (i32, i32, i32) {
    %c0_i32 = arith.constant 0 : i32
    %c0_i32_0 = arith.constant 0 : i32
    return %arg0, %arg1, %c0_i32 : i32, i32, i32
  }
}

</mosaic_0001>

<llo_original>
// kernel: tpu_custom_call.1
$region0: #{tpu_custom_call.1}
  #allocation0 [shape = 'u32[]', space=smem, size = 0x4, offset = 0x4, fixed_abs, tag = 'smem constant byte address 0x4 - core index']
  #allocation1 [shape = 'u32[144,128]{1,0:T(1,128)}', space=vmem, size = 0x12000, scoped, tag = 'internal scratch']
  #allocation2 [shape = 'bf16[4,16,8]{2,1,0:T(16,128)(2,1)}', space=vmem, size = 0x4000, scoped, tag = 'scratch operand']
  #allocation3 [shape = 'bf16[4,16,8]{2,1,0:T(16,128)(2,1)}', space=vmem, size = 0x4000, scoped, tag = 'scratch operand']
  #allocation4 [shape = 'f32[8,32]{1,0:T(8,128)}', space=vmem, size = 0x1000, scoped, tag = 'scratch operand']
  %s0 = inlined_call_operand.hbm [shape: f32[2,16,32], index: 0, kind: input, shape index: {}]
  %s1 = inlined_call_operand.hbm [shape: f32[2,16,32], index: 1, kind: input, shape index: {}]
  %s2 = inlined_call_operand.hbm [shape: f32[2,1,16], index: 2, kind: input, shape index: {}]
  %s3 = inlined_call_operand.hbm [shape: bf16[4,32,8], index: 3, kind: input, shape index: {}]
  %s4 = inlined_call_operand.hbm [shape: f32[4,1,8], index: 4, kind: input, shape index: {}]
  %s5 = inlined_call_operand.hbm [shape: bf16[4,32,8], index: 5, kind: input, shape index: {}]
  %s6 = inlined_call_operand.hbm [shape: f32[4,1,8], index: 6, kind: input, shape index: {}]
  %s7 = inlined_call_operand.hbm [shape: bf16[4,32,8], index: 7, kind: input, shape index: {}]
  %s8 = inlined_call_operand.hbm [shape: f32[4,1,8], index: 8, kind: input, shape index: {}]
  %s9 = inlined_call_operand.hbm [shape: bf16[4,8,32], index: 9, kind: input, shape index: {}]
  %s10 = inlined_call_operand.hbm [shape: f32[1,32], index: 10, kind: input, shape index: {}]
  %s11 = inlined_call_operand.hbm [shape: f32[1,32], index: 11, kind: input, shape index: {}]
  %s12 = inlined_call_operand.hbm [shape: f32[1,32], index: 12, kind: input, shape index: {}]
  %s13 = inlined_call_operand.hbm [shape: f32[2,16,32], index: 13, kind: output, shape index: {}]
  %s14 = sld [smem:[#allocation0]]
  $region155: #{tpu_custom_call.1} parent=0
    _
  %s16 = ssub.s32 1, %s14
  %s17 = scalar_select 0, %s16, %s14
  $region1: #{tpu_custom_call.1} parent=0
    #allocation5 [shape = 'u8[8192]{0}', space=vmem, size = 0x2000, scoped, tag = 'input window, operand 0']
    #allocation6 [shape = 's32[2]{0}', space=sflag, size = 0x8, scoped, tag = 'scoped memory for tpu_custom_call.1']
    #allocation7 [shape = 's32[2]{0}', space=sflag, size = 0x8, scoped, tag = 'scoped memory for tpu_custom_call.1']
    #allocation8 [shape = 'u8[16384]{0}', space=vmem, size = 0x4000, scoped, tag = 'input window, operand 1']
    #allocation9 [shape = 's32[2]{0}', space=sflag, size = 0x8, scoped, tag = 'scoped memory for tpu_custom_call.1']
    #allocation10 [shape = 'u8[1024]{0}', space=vmem, size = 0x400, scoped, tag = 'input window, operand 2']
    #allocation11 [shape = 'u8[32768]{0}', space=vmem, size = 0x8000, scoped, tag = 'input window, operand 3, single buffered']
    #allocation12 [shape = 's32[1]{0}', space=sflag, size = 0x4, scoped, tag = 'scoped memory for tpu_custom_call.1']
    #allocation13 [shape = 'u8[2048]{0}', space=vmem, size = 0x800, scoped, tag = 'input window, operand 4, single buffered']
    #allocation14 [shape = 'u8[32768]{0}', space=vmem, size = 0x8000, scoped, tag = 'input window, operand 5, single buffered']
    #allocation15 [shape = 's32[1]{0}', space=sflag, size = 0x4, scoped, tag = 'scoped memory for tpu_custom_call.1']
    #allocation16 [shape = 'u8[2048]{0}', space=vmem, size = 0x800, scoped, tag = 'input window, operand 6, single buffered']
    #allocation17 [shape = 'u8[32768]{0}', space=vmem, size = 0x8000, scoped, tag = 'input window, operand 7, single buffered']
    #allocation18 [shape = 's32[1]{0}', space=sflag, size = 0x4, scoped, tag = 'scoped memory for tpu_custom_call.1']
    #allocation19 [shape = 'u8[2048]{0}', space=vmem, size = 0x800, scoped, tag = 'input window, operand 8, single buffered']
    #allocation20 [shape = 'u8[8192]{0}', space=vmem, size = 0x2000, scoped, tag = 'input window, operand 9, single buffered']
    #allocation21 [shape = 's32[1]{0}', space=sflag, size = 0x4, scoped, tag = 'scoped memory for tpu_custom_call.1']
    #allocation22 [shape = 'u8[512]{0}', space=vmem, size = 0x400, scoped, tag = 'input window, operand 10, single buffered']
    #allocation23 [shape = 'u8[512]{0}', space=vmem, size = 0x400, scoped, tag = 'input window, operand 11, single buffered']
    #allocation24 [shape = 's32[1]{0}', space=sflag, size = 0x4, scoped, tag = 'scoped memory for tpu_custom_call.1']
    #allocation25 [shape = 'u8[512]{0}', space=vmem, size = 0x400, scoped, tag = 'input window, operand 12, single buffered']
    #allocation26 [shape = 'u8[8192]{0}', space=vmem, size = 0x2000, scoped, tag = 'output window, operand 0']
    %18 = vsyncpa [#allocation6], 0
    %s19 = scalar_lea.sflag [#allocation6], 1
    %20 = vsyncpa %s19, 0
    %21 = vsyncpa [#allocation9], 0
    %s22 = scalar_lea.sflag [#allocation9], 1
    %23 = vsyncpa %s22, 0
    %24 = vsyncpa [#allocation12], 0
    %25 = vsyncpa [#allocation15], 0
    %26 = vsyncpa [#allocation18], 0
    %27 = vsyncpa [#allocation21], 0
    %28 = vsyncpa [#allocation24], 0
    %29 = vsyncpa [#allocation7], 0
    %s30 = scalar_lea.sflag [#allocation7], 1
    %31 = vsyncpa %s30, 0
    loop: start=0, step=1, limit=6
    $region2: #{tpu_custom_call.1} parent=1 // loop_pre_header
      _
    $region3: #{tpu_custom_call.1} parent=1 // loop_header
      %s33 = sphi 0, %s37
      %p34 = scmp.ge.s32.totalorder %s33, 6
      %s40 = sphi 0, %s52
      %s41 = sphi 0, %s48
      %s42 = sphi 0, %s40
      %s43 = sphi 0, %s41
      %s44 = sphi 0, %s42
      %s45 = sphi 0, %s43
      %s57 = sphi 0, %s59
      %s60 = sphi 0, %s57
      %s61 = sphi 0, %s60
      %s77 = sphi 0, %s61
      %s83 = sphi 0, %s85
      %s86 = sphi 0, %s83
      %s87 = sphi 0, %s86
      %s103 = sphi 0, %s87
      %s109 = sphi 0, %s111
      %s112 = sphi 0, %s109
      %s113 = sphi 0, %s112
      %s129 = sphi 0, %s113
      %s133 = sphi 0, %s133
      %s135 = sphi 0, %s133
      %s136 = sphi 0, %s135
      %s150 = sphi 0, %s136
      %s154 = sphi 0, %s154
      %s156 = sphi 0, %s154
      %s157 = sphi 0, %s156
      %s171 = sphi 0, %s157
      %s175 = sphi 0, %s175
      %s177 = sphi 0, %s175
      %s178 = sphi 0, %s177
      %s192 = sphi 0, %s178
      %s196 = sphi 0, %s196
      %s198 = sphi 0, %s196
      %s199 = sphi 0, %s198
      %s213 = sphi 0, %s199
      %s217 = sphi 0, %s217
      %s219 = sphi 0, %s217
      %s220 = sphi 0, %s219
      %s234 = sphi 0, %s220
      %s238 = sphi 0, %s238
      %s240 = sphi 0, %s238
      %s241 = sphi 0, %s240
      %s255 = sphi 0, %s241
      %s259 = sphi 0, %s259
      %s261 = sphi 0, %s259
      %s262 = sphi 0, %s261
      %s276 = sphi 0, %s262
      %s280 = sphi 0, %s280
      %s282 = sphi 0, %s280
      %s283 = sphi 0, %s282
      %s297 = sphi 0, %s283
      %s301 = sphi 0, %s301
      %s303 = sphi 0, %s301
      %s304 = sphi 0, %s303
      %s318 = sphi 0, %s304
      %s322 = sphi 0, %s322
      %s324 = sphi 0, %s322
      %s325 = sphi 0, %s324
      %s339 = sphi 0, %s325
      %s347 = sphi 0, %s349
      %s350 = sphi 0, %s347
      %s351 = sphi 0, %s350
      %s367 = sphi 0, %s351
    $region4: #{tpu_custom_call.1} parent=1 // loop_header_branch
      %36 = sbr.rel (%p34) target = $region8
    $region5: #{tpu_custom_call.1} parent=1 // loop_body
      %s38 = ssub.s32 %s33, 1
      %s39 = ssub.s32 %s33, 2
      %s46 = sadd.s32 1, %s41
      %p47 = scmp.ge.s32.totalorder %s46, 2
      %s48 = scalar_select %p47, 0, %s46
      %s49 = sadd.s32 1, %s40
      %s50 = scalar_select %p47, %s49, %s40
      %p51 = scmp.ge.s32.totalorder %s50, 2
      %s52 = scalar_select %p51, 0, %s50
      %s53 = ssub.s32 %s40, %s52
      %s54 = ssub.s32 %s41, %s48
      %s55 = sor.u32 %s53, %s54
      %p56 = scmp.eq.s32.totalorder %s55, 0
      %s58 = sadd.s32 %s57, 1
      %s59 = scalar_select %p56, %s57, %s58
      %p62 = pneg %p56
      %p63 = scmp.eq.s32.totalorder %s33, 3
      %p64 = por %p62, %p63
      %p65 = scmp.ne.s32.totalorder %s57, %s60
      %p66 = scmp.eq.s32.totalorder %s33, 0
      %p67 = por %p65, %p66
      %p68 = scmp.ne.s32.totalorder %s57, %s60
      %p69 = scmp.eq.s32.totalorder %s38, 3
      %p70 = por %p68, %p69
      %p71 = scmp.ne.s32.totalorder %s60, %s61
      %p72 = scmp.eq.s32.totalorder %s38, 0
      %p73 = por %p71, %p72
      %p74 = scmp.ne.s32.totalorder %s60, %s61
      %p75 = scmp.eq.s32.totalorder %s39, 3
      %p76 = por %p74, %p75
      %p78 = scmp.ne.s32.totalorder %s61, %s77
      %p79 = scmp.eq.s32.totalorder %s39, 0
      %p80 = por %p78, %p79
      %s81 = ssub.s32 %s40, %s52
      %p82 = scmp.eq.s32.totalorder %s81, 0
      %s84 = sadd.s32 %s83, 1
      %s85 = scalar_select %p82, %s83, %s84
      %p88 = pneg %p82
      %p89 = scmp.eq.s32.totalorder %s33, 3
      %p90 = por %p88, %p89
      %p91 = scmp.ne.s32.totalorder %s83, %s86
      %p92 = scmp.eq.s32.totalorder %s33, 0
      %p93 = por %p91, %p92
      %p94 = scmp.ne.s32.totalorder %s83, %s86
      %p95 = scmp.eq.s32.totalorder %s38, 3
      %p96 = por %p94, %p95
      %p97 = scmp.ne.s32.totalorder %s86, %s87
      %p98 = scmp.eq.s32.totalorder %s38, 0
      %p99 = por %p97, %p98
      %p100 = scmp.ne.s32.totalorder %s86, %s87
      %p101 = scmp.eq.s32.totalorder %s39, 3
      %p102 = por %p100, %p101
      %p104 = scmp.ne.s32.totalorder %s87, %s103
      %p105 = scmp.eq.s32.totalorder %s39, 0
      %p106 = por %p104, %p105
      %s107 = ssub.s32 %s40, %s52
      %p108 = scmp.eq.s32.totalorder %s107, 0
      %s110 = sadd.s32 %s109, 1
      %s111 = scalar_select %p108, %s109, %s110
      %p114 = pneg %p108
      %p115 = scmp.eq.s32.totalorder %s33, 3
      %p116 = por %p114, %p115
      %p117 = scmp.ne.s32.totalorder %s109, %s112
      %p118 = scmp.eq.s32.totalorder %s33, 0
      %p119 = por %p117, %p118
      %p120 = scmp.ne.s32.totalorder %s109, %s112
      %p121 = scmp.eq.s32.totalorder %s38, 3
      %p122 = por %p120, %p121
      %p123 = scmp.ne.s32.totalorder %s112, %s113
      %p124 = scmp.eq.s32.totalorder %s38, 0
      %p125 = por %p123, %p124
      %p126 = scmp.ne.s32.totalorder %s112, %s113
      %p127 = scmp.eq.s32.totalorder %s39, 3
      %p128 = por %p126, %p127
      %p130 = scmp.ne.s32.totalorder %s113, %s129
      %p131 = scmp.eq.s32.totalorder %s39, 0
      %p132 = por %p130, %p131
      %s134 = sadd.s32 %s133, 1
      %p137 = scmp.eq.s32.totalorder %s33, 3
      %p138 = scmp.ne.s32.totalorder %s133, %s135
      %p139 = scmp.eq.s32.totalorder %s33, 0
      %p140 = por %p138, %p139
      %p141 = scmp.ne.s32.totalorder %s133, %s135
      %p142 = scmp.eq.s32.totalorder %s38, 3
      %p143 = por %p141, %p142
      %p144 = scmp.ne.s32.totalorder %s135, %s136
      %p145 = scmp.eq.s32.totalorder %s38, 0
      %p146 = por %p144, %p145
      %p147 = scmp.ne.s32.totalorder %s135, %s136
      %p148 = scmp.eq.s32.totalorder %s39, 3
      %p149 = por %p147, %p148
      %p151 = scmp.ne.s32.totalorder %s136, %s150
      %p152 = scmp.eq.s32.totalorder %s39, 0
      %p153 = por %p151, %p152
      %s155 = sadd.s32 %s154, 1
      %p158 = scmp.eq.s32.totalorder %s33, 3
      %p159 = scmp.ne.s32.totalorder %s154, %s156
      %p160 = scmp.eq.s32.totalorder %s33, 0
      %p161 = por %p159, %p160
      %p162 = scmp.ne.s32.totalorder %s154, %s156
      %p163 = scmp.eq.s32.totalorder %s38, 3
      %p164 = por %p162, %p163
      %p165 = scmp.ne.s32.totalorder %s156, %s157
      %p166 = scmp.eq.s32.totalorder %s38, 0
      %p167 = por %p165, %p166
      %p168 = scmp.ne.s32.totalorder %s156, %s157
      %p169 = scmp.eq.s32.totalorder %s39, 3
      %p170 = por %p168, %p169
      %p172 = scmp.ne.s32.totalorder %s157, %s171
      %p173 = scmp.eq.s32.totalorder %s39, 0
      %p174 = por %p172, %p173
      %s176 = sadd.s32 %s175, 1
      %p179 = scmp.eq.s32.totalorder %s33, 3
      %p180 = scmp.ne.s32.totalorder %s175, %s177
      %p181 = scmp.eq.s32.totalorder %s33, 0
      %p182 = por %p180, %p181
      %p183 = scmp.ne.s32.totalorder %s175, %s177
      %p184 = scmp.eq.s32.totalorder %s38, 3
      %p185 = por %p183, %p184
      %p186 = scmp.ne.s32.totalorder %s177, %s178
      %p187 = scmp.eq.s32.totalorder %s38, 0
      %p188 = por %p186, %p187
      %p189 = scmp.ne.s32.totalorder %s177, %s178
      %p190 = scmp.eq.s32.totalorder %s39, 3
      %p191 = por %p189, %p190
      %p193 = scmp.ne.s32.totalorder %s178, %s192
      %p194 = scmp.eq.s32.totalorder %s39, 0
      %p195 = por %p193, %p194
      %s197 = sadd.s32 %s196, 1
      %p200 = scmp.eq.s32.totalorder %s33, 3
      %p201 = scmp.ne.s32.totalorder %s196, %s198
      %p202 = scmp.eq.s32.totalorder %s33, 0
      %p203 = por %p201, %p202
      %p204 = scmp.ne.s32.totalorder %s196, %s198
      %p205 = scmp.eq.s32.totalorder %s38, 3
      %p206 = por %p204, %p205
      %p207 = scmp.ne.s32.totalorder %s198, %s199
      %p208 = scmp.eq.s32.totalorder %s38, 0
      %p209 = por %p207, %p208
      %p210 = scmp.ne.s32.totalorder %s198, %s199
      %p211 = scmp.eq.s32.totalorder %s39, 3
      %p212 = por %p210, %p211
      %p214 = scmp.ne.s32.totalorder %s199, %s213
      %p215 = scmp.eq.s32.totalorder %s39, 0
      %p216 = por %p214, %p215
      %s218 = sadd.s32 %s217, 1
      %p221 = scmp.eq.s32.totalorder %s33, 3
      %p222 = scmp.ne.s32.totalorder %s217, %s219
      %p223 = scmp.eq.s32.totalorder %s33, 0
      %p224 = por %p222, %p223
      %p225 = scmp.ne.s32.totalorder %s217, %s219
      %p226 = scmp.eq.s32.totalorder %s38, 3
      %p227 = por %p225, %p226
      %p228 = scmp.ne.s32.totalorder %s219, %s220
      %p229 = scmp.eq.s32.totalorder %s38, 0
      %p230 = por %p228, %p229
      %p231 = scmp.ne.s32.totalorder %s219, %s220
      %p232 = scmp.eq.s32.totalorder %s39, 3
      %p233 = por %p231, %p232
      %p235 = scmp.ne.s32.totalorder %s220, %s234
      %p236 = scmp.eq.s32.totalorder %s39, 0
      %p237 = por %p235, %p236
      %s239 = sadd.s32 %s238, 1
      %p242 = scmp.eq.s32.totalorder %s33, 3
      %p243 = scmp.ne.s32.totalorder %s238, %s240
      %p244 = scmp.eq.s32.totalorder %s33, 0
      %p245 = por %p243, %p244
      %p246 = scmp.ne.s32.totalorder %s238, %s240
      %p247 = scmp.eq.s32.totalorder %s38, 3
      %p248 = por %p246, %p247
      %p249 = scmp.ne.s32.totalorder %s240, %s241
      %p250 = scmp.eq.s32.totalorder %s38, 0
      %p251 = por %p249, %p250
      %p252 = scmp.ne.s32.totalorder %s240, %s241
      %p253 = scmp.eq.s32.totalorder %s39, 3
      %p254 = por %p252, %p253
      %p256 = scmp.ne.s32.totalorder %s241, %s255
      %p257 = scmp.eq.s32.totalorder %s39, 0
      %p258 = por %p256, %p257
      %s260 = sadd.s32 %s259, 1
      %p263 = scmp.eq.s32.totalorder %s33, 3
      %p264 = scmp.ne.s32.totalorder %s259, %s261
      %p265 = scmp.eq.s32.totalorder %s33, 0
      %p266 = por %p264, %p265
      %p267 = scmp.ne.s32.totalorder %s259, %s261
      %p268 = scmp.eq.s32.totalorder %s38, 3
      %p269 = por %p267, %p268
      %p270 = scmp.ne.s32.totalorder %s261, %s262
      %p271 = scmp.eq.s32.totalorder %s38, 0
      %p272 = por %p270, %p271
      %p273 = scmp.ne.s32.totalorder %s261, %s262
      %p274 = scmp.eq.s32.totalorder %s39, 3
      %p275 = por %p273, %p274
      %p277 = scmp.ne.s32.totalorder %s262, %s276
      %p278 = scmp.eq.s32.totalorder %s39, 0
      %p279 = por %p277, %p278
      %s281 = sadd.s32 %s280, 1
      %p284 = scmp.eq.s32.totalorder %s33, 3
      %p285 = scmp.ne.s32.totalorder %s280, %s282
      %p286 = scmp.eq.s32.totalorder %s33, 0
      %p287 = por %p285, %p286
      %p288 = scmp.ne.s32.totalorder %s280, %s282
      %p289 = scmp.eq.s32.totalorder %s38, 3
      %p290 = por %p288, %p289
      %p291 = scmp.ne.s32.totalorder %s282, %s283
      %p292 = scmp.eq.s32.totalorder %s38, 0
      %p293 = por %p291, %p292
      %p294 = scmp.ne.s32.totalorder %s282, %s283
      %p295 = scmp.eq.s32.totalorder %s39, 3
      %p296 = por %p294, %p295
      %p298 = scmp.ne.s32.totalorder %s283, %s297
      %p299 = scmp.eq.s32.totalorder %s39, 0
      %p300 = por %p298, %p299
      %s302 = sadd.s32 %s301, 1
      %p305 = scmp.eq.s32.totalorder %s33, 3
      %p306 = scmp.ne.s32.totalorder %s301, %s303
      %p307 = scmp.eq.s32.totalorder %s33, 0
      %p308 = por %p306, %p307
      %p309 = scmp.ne.s32.totalorder %s301, %s303
      %p310 = scmp.eq.s32.totalorder %s38, 3
      %p311 = por %p309, %p310
      %p312 = scmp.ne.s32.totalorder %s303, %s304
      %p313 = scmp.eq.s32.totalorder %s38, 0
      %p314 = por %p312, %p313
      %p315 = scmp.ne.s32.totalorder %s303, %s304
      %p316 = scmp.eq.s32.totalorder %s39, 3
      %p317 = por %p315, %p316
      %p319 = scmp.ne.s32.totalorder %s304, %s318
      %p320 = scmp.eq.s32.totalorder %s39, 0
      %p321 = por %p319, %p320
      %s323 = sadd.s32 %s322, 1
      %p326 = scmp.eq.s32.totalorder %s33, 3
      %p327 = scmp.ne.s32.totalorder %s322, %s324
      %p328 = scmp.eq.s32.totalorder %s33, 0
      %p329 = por %p327, %p328
      %p330 = scmp.ne.s32.totalorder %s322, %s324
      %p331 = scmp.eq.s32.totalorder %s38, 3
      %p332 = por %p330, %p331
      %p333 = scmp.ne.s32.totalorder %s324, %s325
      %p334 = scmp.eq.s32.totalorder %s38, 0
      %p335 = por %p333, %p334
      %p336 = scmp.ne.s32.totalorder %s324, %s325
      %p337 = scmp.eq.s32.totalorder %s39, 3
      %p338 = por %p336, %p337
      %p340 = scmp.ne.s32.totalorder %s325, %s339
      %p341 = scmp.eq.s32.totalorder %s39, 0
      %p342 = por %p340, %p341
      %s343 = ssub.s32 %s40, %s52
      %s344 = ssub.s32 %s41, %s48
      %s345 = sor.u32 %s343, %s344
      %p346 = scmp.eq.s32.totalorder %s345, 0
      %s348 = sadd.s32 %s347, 1
      %s349 = scalar_select %p346, %s347, %s348
      %p352 = pneg %p346
      %p353 = scmp.eq.s32.totalorder %s33, 3
      %p354 = por %p352, %p353
      %p355 = scmp.ne.s32.totalorder %s347, %s350
      %p356 = scmp.eq.s32.totalorder %s33, 0
      %p357 = por %p355, %p356
      %p358 = scmp.ne.s32.totalorder %s347, %s350
      %p359 = scmp.eq.s32.totalorder %s38, 3
      %p360 = por %p358, %p359
      %p361 = scmp.ne.s32.totalorder %s350, %s351
      %p362 = scmp.eq.s32.totalorder %s38, 0
      %p363 = por %p361, %p362
      %p364 = scmp.ne.s32.totalorder %s350, %s351
      %p365 = scmp.eq.s32.totalorder %s39, 3
      %p366 = por %p364, %p365
      %p368 = scmp.ne.s32.totalorder %s351, %s367
      %p369 = scmp.eq.s32.totalorder %s39, 0
      %p370 = por %p368, %p369
      %p371 = scmp.le.s32.totalorder 1, %s33
      %p372 = scmp.lt.s32.totalorder %s33, 5
      %p373 = pnand %p371, %p372
      %p374 = pneg %p373
      // Predicated region
      $region9: #{tpu_custom_call.1} parent=5 // pred_check
        _
      $region10: #{tpu_custom_call.1} parent=5 // pred_check_branch
        %376 = sbr.rel (%p373) target = $region12
      $region11: #{tpu_custom_call.1} parent=5 // pred_region
        %s377 = ssub.s32 %s33, 1
        // Predicated region
        $region13: #{tpu_custom_call.1} parent=11 // pred_check
          %p378 = pneg %p146
        $region14: #{tpu_custom_call.1} parent=11 // pred_check_branch
          %380 = sbr.rel (%p378) target = $region16
        $region15: #{tpu_custom_call.1} parent=11 // pred_region
          %s382 = ssub.s32 1024, 1024
          %383 = vsyncadd [#allocation12], %s382
          %s384 = sshll.u32 [#allocation11], 4
          %s385 = int_to_ptr.vmem [resolvable:$true] %s384
          %390 = dma.hbm_to_vmem [thread:$0]  %s3, 1024, %s385, [#allocation12], 64, 64, 4
        $region16: #{tpu_custom_call.1} parent=11 // pred_fallthru
          _
        // Predicated region
        $region17: #{tpu_custom_call.1} parent=11 // pred_check
          %p391 = pneg %p167
        $region18: #{tpu_custom_call.1} parent=11 // pred_check_branch
          %393 = sbr.rel (%p391) target = $region20
        $region19: #{tpu_custom_call.1} parent=11 // pred_region
          %s395 = ssub.s32 64, 64
          %396 = vsyncadd [#allocation12], %s395
          %s397 = sshll.u32 [#allocation13], 4
          %s398 = int_to_ptr.vmem [resolvable:$true] %s397
          %403 = dma.hbm_to_vmem [thread:$0]  %s4, 64, %s398, [#allocation12], 16, 16, 1
        $region20: #{tpu_custom_call.1} parent=11 // pred_fallthru
          _
        // Predicated region
        $region21: #{tpu_custom_call.1} parent=11 // pred_check
          %p404 = pneg %p188
        $region22: #{tpu_custom_call.1} parent=11 // pred_check_branch
          %406 = sbr.rel (%p404) target = $region24
        $region23: #{tpu_custom_call.1} parent=11 // pred_region
          %s408 = ssub.s32 1024, 1024
          %409 = vsyncadd [#allocation15], %s408
          %s410 = sshll.u32 [#allocation14], 4
          %s411 = int_to_ptr.vmem [resolvable:$true] %s410
          %416 = dma.hbm_to_vmem [thread:$0]  %s5, 1024, %s411, [#allocation15], 64, 64, 4
        $region24: #{tpu_custom_call.1} parent=11 // pred_fallthru
          _
        // Predicated region
        $region25: #{tpu_custom_call.1} parent=11 // pred_check
          %p417 = pneg %p209
        $region26: #{tpu_custom_call.1} parent=11 // pred_check_branch
          %419 = sbr.rel (%p417) target = $region28
        $region27: #{tpu_custom_call.1} parent=11 // pred_region
          %s421 = ssub.s32 64, 64
          %422 = vsyncadd [#allocation15], %s421
          %s423 = sshll.u32 [#allocation16], 4
          %s424 = int_to_ptr.vmem [resolvable:$true] %s423
          %429 = dma.hbm_to_vmem [thread:$0]  %s6, 64, %s424, [#allocation15], 16, 16, 1
        $region28: #{tpu_custom_call.1} parent=11 // pred_fallthru
          _
        // Predicated region
        $region29: #{tpu_custom_call.1} parent=11 // pred_check
          %p430 = pneg %p230
        $region30: #{tpu_custom_call.1} parent=11 // pred_check_branch
          %432 = sbr.rel (%p430) target = $region32
        $region31: #{tpu_custom_call.1} parent=11 // pred_region
          %s434 = ssub.s32 1024, 1024
          %435 = vsyncadd [#allocation18], %s434
          %s436 = sshll.u32 [#allocation17], 4
          %s437 = int_to_ptr.vmem [resolvable:$true] %s436
          %442 = dma.hbm_to_vmem [thread:$0]  %s7, 1024, %s437, [#allocation18], 64, 64, 4
        $region32: #{tpu_custom_call.1} parent=11 // pred_fallthru
          _
        // Predicated region
        $region33: #{tpu_custom_call.1} parent=11 // pred_check
          %p443 = pneg %p251
        $region34: #{tpu_custom_call.1} parent=11 // pred_check_branch
          %445 = sbr.rel (%p443) target = $region36
        $region35: #{tpu_custom_call.1} parent=11 // pred_region
          %s447 = ssub.s32 64, 64
          %448 = vsyncadd [#allocation18], %s447
          %s449 = sshll.u32 [#allocation19], 4
          %s450 = int_to_ptr.vmem [resolvable:$true] %s449
          %455 = dma.hbm_to_vmem [thread:$0]  %s8, 64, %s450, [#allocation18], 16, 16, 1
        $region36: #{tpu_custom_call.1} parent=11 // pred_fallthru
          _
        // Predicated region
        $region37: #{tpu_custom_call.1} parent=11 // pred_check
          %p456 = pneg %p272
        $region38: #{tpu_custom_call.1} parent=11 // pred_check_branch
          %458 = sbr.rel (%p456) target = $region40
        $region39: #{tpu_custom_call.1} parent=11 // pred_region
          %s460 = ssub.s32 256, 256
          %461 = vsyncadd [#allocation21], %s460
          %s462 = sshll.u32 [#allocation20], 4
          %s463 = int_to_ptr.vmem [resolvable:$true] %s462
          %468 = dma.hbm_to_vmem [thread:$0]  %s9, 256, %s463, [#allocation21], 64, 64, 4
        $region40: #{tpu_custom_call.1} parent=11 // pred_fallthru
          _
        // Predicated region
        $region41: #{tpu_custom_call.1} parent=11 // pred_check
          %p469 = pneg %p293
        $region42: #{tpu_custom_call.1} parent=11 // pred_check_branch
          %471 = sbr.rel (%p469) target = $region44
        $region43: #{tpu_custom_call.1} parent=11 // pred_region
          %s473 = ssub.s32 16, 16
          %474 = vsyncadd [#allocation21], %s473
          %s476 = sshll.u32 [#allocation22], 4
          %s477 = int_to_ptr.vmem [resolvable:$true] %s476
          %479 = dma.hbm_to_vmem [thread:$0]  %s10, 16, %s477, [#allocation21]
        $region44: #{tpu_custom_call.1} parent=11 // pred_fallthru
          _
        // Predicated region
        $region45: #{tpu_custom_call.1} parent=11 // pred_check
          %p480 = pneg %p314
        $region46: #{tpu_custom_call.1} parent=11 // pred_check_branch
          %482 = sbr.rel (%p480) target = $region48
        $region47: #{tpu_custom_call.1} parent=11 // pred_region
          %s484 = ssub.s32 16, 16
          %485 = vsyncadd [#allocation24], %s484
          %s487 = sshll.u32 [#allocation23], 4
          %s488 = int_to_ptr.vmem [resolvable:$true] %s487
          %490 = dma.hbm_to_vmem [thread:$0]  %s11, 16, %s488, [#allocation24]
        $region48: #{tpu_custom_call.1} parent=11 // pred_fallthru
          _
        // Predicated region
        $region49: #{tpu_custom_call.1} parent=11 // pred_check
          %p491 = pneg %p335
        $region50: #{tpu_custom_call.1} parent=11 // pred_check_branch
          %493 = sbr.rel (%p491) target = $region52
        $region51: #{tpu_custom_call.1} parent=11 // pred_region
          %s495 = ssub.s32 16, 16
          %496 = vsyncadd [#allocation24], %s495
          %s498 = sshll.u32 [#allocation25], 4
          %s499 = int_to_ptr.vmem [resolvable:$true] %s498
          %501 = dma.hbm_to_vmem [thread:$0]  %s12, 16, %s499, [#allocation24]
        $region52: #{tpu_custom_call.1} parent=11 // pred_fallthru
          _
      $region12: #{tpu_custom_call.1} parent=5 // pred_fallthru
        _
      %p502 = scmp.lt.s32.totalorder %s33, 4
      // Predicated region
      $region53: #{tpu_custom_call.1} parent=5 // pred_check
        %p503 = pneg %p502
      $region54: #{tpu_custom_call.1} parent=5 // pred_check_branch
        %505 = sbr.rel (%p503) target = $region56
      $region55: #{tpu_custom_call.1} parent=5 // pred_region
        // Predicated region
        $region57: #{tpu_custom_call.1} parent=55 // pred_check
          %p506 = pneg %p67
        $region58: #{tpu_custom_call.1} parent=55 // pred_check_branch
          %508 = sbr.rel (%p506) target = $region60
        $region59: #{tpu_custom_call.1} parent=55 // pred_region
          %s509 = sand.u32 %s57, 1
          %s510 = scalar_lea.sflag [#allocation6], %s509
          %s511 = sand.u32 %s57, 1
          %s512 = smul.addr %s511, 8
          %s513 = scalar_lea.vmem [#allocation5], %s512
          %s515 = ssub.s32 128, 128
          %516 = vsyncadd %s510, %s515
          %s517 = smul.addr %s40, 2
          %s518 = sadd.s32 %s41, %s517
          %s519 = smul.addr %s518, 128
          %s520 = scalar_lea.hbm %s0, %s519
          %s522 = sshll.u32 %s513, 4
          %s523 = int_to_ptr.vmem [resolvable:$true] %s522
          %525 = dma.hbm_to_vmem [thread:$0]  %s520, 128, %s523, %s510
        $region60: #{tpu_custom_call.1} parent=55 // pred_fallthru
          _
        // Predicated region
        $region61: #{tpu_custom_call.1} parent=55 // pred_check
          %p526 = pneg %p93
        $region62: #{tpu_custom_call.1} parent=55 // pred_check_branch
          %528 = sbr.rel (%p526) target = $region64
        $region63: #{tpu_custom_call.1} parent=55 // pred_region
          %s529 = sand.u32 %s33, 1
          %s530 = scalar_lea.sflag [#allocation9], %s529
          %s531 = sand.u32 %s83, 1
          %s532 = smul.addr %s531, 16
          %s533 = scalar_lea.vmem [#allocation8], %s532
          %s535 = ssub.s32 256, 256
          %536 = vsyncadd %s530, %s535
          %s537 = smul.addr %s40, 2
          %s538 = smul.addr %s537, 128
          %s539 = scalar_lea.hbm %s1, %s538
          %s540 = sshll.u32 %s533, 4
          %s541 = int_to_ptr.vmem [resolvable:$true] %s540
          %546 = dma.hbm_to_vmem [thread:$0]  %s539, 256, %s541, %s530, 128, 128, 8
        $region64: #{tpu_custom_call.1} parent=55 // pred_fallthru
          _
        // Predicated region
        $region65: #{tpu_custom_call.1} parent=55 // pred_check
          %p547 = pneg %p119
        $region66: #{tpu_custom_call.1} parent=55 // pred_check_branch
          %549 = sbr.rel (%p547) target = $region68
        $region67: #{tpu_custom_call.1} parent=55 // pred_region
          %s550 = sand.u32 %s33, 1
          %s551 = scalar_lea.sflag [#allocation9], %s550
          %s552 = sand.u32 %s109, 1
          %s553 = scalar_lea.vmem [#allocation10], %s552
          %s555 = ssub.s32 16, 16
          %556 = vsyncadd %s551, %s555
          %s557 = smul.addr %s40, 16
          %s558 = scalar_lea.hbm %s2, %s557
          %s560 = sshll.u32 %s553, 4
          %s561 = int_to_ptr.vmem [resolvable:$true] %s560
          %563 = dma.hbm_to_vmem [thread:$0]  %s558, 16, %s561, %s551
        $region68: #{tpu_custom_call.1} parent=55 // pred_fallthru
          _
      $region56: #{tpu_custom_call.1} parent=5 // pred_fallthru
        _
      %p564 = scmp.le.s32.totalorder 1, %s33
      %p565 = scmp.lt.s32.totalorder %s33, 5
      %p566 = pnand %p564, %p565
      %p567 = pneg %p566
      // Predicated region
      $region69: #{tpu_custom_call.1} parent=5 // pred_check
        _
      $region70: #{tpu_custom_call.1} parent=5 // pred_check_branch
        %569 = sbr.rel (%p566) target = $region72
      $region71: #{tpu_custom_call.1} parent=5 // pred_region
        %s570 = ssub.s32 %s33, 1
        %s571 = sand.u32 %s60, 1
        %s572 = scalar_lea.sflag [#allocation6], %s571
        %s573 = sand.u32 %s60, 1
        %s574 = smul.addr %s573, 8
        %s575 = scalar_lea.vmem [#allocation5], %s574
        // Predicated region
        $region73: #{tpu_custom_call.1} parent=71 // pred_check
          %p576 = pneg %p73
        $region74: #{tpu_custom_call.1} parent=71 // pred_check_branch
          %578 = sbr.rel (%p576) target = $region76
        $region75: #{tpu_custom_call.1} parent=71 // pred_region
          %579 = dma.done %s572, 128
        $region76: #{tpu_custom_call.1} parent=71 // pred_fallthru
          _
        %s580 = sand.u32 %s38, 1
        %s581 = scalar_lea.sflag [#allocation9], %s580
        %s582 = sand.u32 %s86, 1
        %s583 = smul.addr %s582, 16
        %s584 = scalar_lea.vmem [#allocation8], %s583
        // Predicated region
        $region77: #{tpu_custom_call.1} parent=71 // pred_check
          %p585 = pneg %p99
        $region78: #{tpu_custom_call.1} parent=71 // pred_check_branch
          %587 = sbr.rel (%p585) target = $region80
        $region79: #{tpu_custom_call.1} parent=71 // pred_region
          %588 = dma.done %s581, 256
        $region80: #{tpu_custom_call.1} parent=71 // pred_fallthru
          _
        %s589 = sand.u32 %s38, 1
        %s590 = scalar_lea.sflag [#allocation9], %s589
        %s591 = sand.u32 %s112, 1
        %s592 = scalar_lea.vmem [#allocation10], %s591
        // Predicated region
        $region81: #{tpu_custom_call.1} parent=71 // pred_check
          %p593 = pneg %p125
        $region82: #{tpu_custom_call.1} parent=71 // pred_check_branch
          %595 = sbr.rel (%p593) target = $region84
        $region83: #{tpu_custom_call.1} parent=71 // pred_region
          %596 = dma.done %s590, 16
        $region84: #{tpu_custom_call.1} parent=71 // pred_fallthru
          _
        // Predicated region
        $region85: #{tpu_custom_call.1} parent=71 // pred_check
          %p597 = pneg %p146
        $region86: #{tpu_custom_call.1} parent=71 // pred_check_branch
          %599 = sbr.rel (%p597) target = $region88
        $region87: #{tpu_custom_call.1} parent=71 // pred_region
          %600 = dma.done [#allocation12], 1024
        $region88: #{tpu_custom_call.1} parent=71 // pred_fallthru
          _
        // Predicated region
        $region89: #{tpu_custom_call.1} parent=71 // pred_check
          %p601 = pneg %p167
        $region90: #{tpu_custom_call.1} parent=71 // pred_check_branch
          %603 = sbr.rel (%p601) target = $region92
        $region91: #{tpu_custom_call.1} parent=71 // pred_region
          %604 = dma.done [#allocation12], 64
        $region92: #{tpu_custom_call.1} parent=71 // pred_fallthru
          _
        // Predicated region
        $region93: #{tpu_custom_call.1} parent=71 // pred_check
          %p605 = pneg %p188
        $region94: #{tpu_custom_call.1} parent=71 // pred_check_branch
          %607 = sbr.rel (%p605) target = $region96
        $region95: #{tpu_custom_call.1} parent=71 // pred_region
          %608 = dma.done [#allocation15], 1024
        $region96: #{tpu_custom_call.1} parent=71 // pred_fallthru
          _
        // Predicated region
        $region97: #{tpu_custom_call.1} parent=71 // pred_check
          %p609 = pneg %p209
        $region98: #{tpu_custom_call.1} parent=71 // pred_check_branch
          %611 = sbr.rel (%p609) target = $region100
        $region99: #{tpu_custom_call.1} parent=71 // pred_region
          %612 = dma.done [#allocation15], 64
        $region100: #{tpu_custom_call.1} parent=71 // pred_fallthru
          _
        // Predicated region
        $region101: #{tpu_custom_call.1} parent=71 // pred_check
          %p613 = pneg %p230
        $region102: #{tpu_custom_call.1} parent=71 // pred_check_branch
          %615 = sbr.rel (%p613) target = $region104
        $region103: #{tpu_custom_call.1} parent=71 // pred_region
          %616 = dma.done [#allocation18], 1024
        $region104: #{tpu_custom_call.1} parent=71 // pred_fallthru
          _
        // Predicated region
        $region105: #{tpu_custom_call.1} parent=71 // pred_check
          %p617 = pneg %p251
        $region106: #{tpu_custom_call.1} parent=71 // pred_check_branch
          %619 = sbr.rel (%p617) target = $region108
        $region107: #{tpu_custom_call.1} parent=71 // pred_region
          %620 = dma.done [#allocation18], 64
        $region108: #{tpu_custom_call.1} parent=71 // pred_fallthru
          _
        // Predicated region
        $region109: #{tpu_custom_call.1} parent=71 // pred_check
          %p621 = pneg %p272
        $region110: #{tpu_custom_call.1} parent=71 // pred_check_branch
          %623 = sbr.rel (%p621) target = $region112
        $region111: #{tpu_custom_call.1} parent=71 // pred_region
          %624 = dma.done [#allocation21], 256
        $region112: #{tpu_custom_call.1} parent=71 // pred_fallthru
          _
        // Predicated region
        $region113: #{tpu_custom_call.1} parent=71 // pred_check
          %p625 = pneg %p293
        $region114: #{tpu_custom_call.1} parent=71 // pred_check_branch
          %627 = sbr.rel (%p625) target = $region116
        $region115: #{tpu_custom_call.1} parent=71 // pred_region
          %628 = dma.done [#allocation21], 16
        $region116: #{tpu_custom_call.1} parent=71 // pred_fallthru
          _
        // Predicated region
        $region117: #{tpu_custom_call.1} parent=71 // pred_check
          %p629 = pneg %p314
        $region118: #{tpu_custom_call.1} parent=71 // pred_check_branch
          %631 = sbr.rel (%p629) target = $region120
        $region119: #{tpu_custom_call.1} parent=71 // pred_region
          %632 = dma.done [#allocation24], 16
        $region120: #{tpu_custom_call.1} parent=71 // pred_fallthru
          _
        // Predicated region
        $region121: #{tpu_custom_call.1} parent=71 // pred_check
          %p633 = pneg %p335
        $region122: #{tpu_custom_call.1} parent=71 // pred_check_branch
          %635 = sbr.rel (%p633) target = $region124
        $region123: #{tpu_custom_call.1} parent=71 // pred_region
          %636 = dma.done [#allocation24], 16
        $region124: #{tpu_custom_call.1} parent=71 // pred_fallthru
          _
        %s637 = sand.u32 %s60, 1
        %s638 = scalar_lea.sflag [#allocation6], %s637
        %s639 = sand.u32 %s60, 1
        %s640 = smul.addr %s639, 8
        %s641 = scalar_lea.vmem [#allocation5], %s640
        %p642 = pneg %p73
        %p643 = pneg %p70
        %s644 = sand.u32 %s38, 1
        %s645 = scalar_lea.sflag [#allocation9], %s644
        %s646 = sand.u32 %s86, 1
        %s647 = smul.addr %s646, 16
        %s648 = scalar_lea.vmem [#allocation8], %s647
        %p649 = pneg %p99
        %p650 = pneg %p96
        %s651 = sand.u32 %s38, 1
        %s652 = scalar_lea.sflag [#allocation9], %s651
        %s653 = sand.u32 %s112, 1
        %s654 = scalar_lea.vmem [#allocation10], %s653
        %p655 = pneg %p125
        %p656 = pneg %p122
        %p657 = pneg %p146
        %p658 = pneg %p143
        %p659 = pneg %p167
        %p660 = pneg %p164
        %p661 = pneg %p188
        %p662 = pneg %p185
        %p663 = pneg %p209
        %p664 = pneg %p206
        %p665 = pneg %p230
        %p666 = pneg %p227
        %p667 = pneg %p251
        %p668 = pneg %p248
        %p669 = pneg %p272
        %p670 = pneg %p269
        %p671 = pneg %p293
        %p672 = pneg %p290
        %p673 = pneg %p314
        %p674 = pneg %p311
        %p675 = pneg %p335
        %p676 = pneg %p332
        %p677 = pneg %p363
        %p678 = pneg %p360
        %s679 = sand.u32 %s350, 1
        %s680 = scalar_lea.sflag [#allocation7], %s679
        %s681 = sand.u32 %s350, 1
        %s682 = smul.addr %s681, 8
        %s683 = scalar_lea.vmem [#allocation26], %s682
        %v685 = vld [vmem:[%s575] sm:$0xff]
        %v686 = vld [vmem:[%s592] sm:$0x1]
        %v687 = vpack.c.bf16 %v685, %v685
        %p688 = scmp.eq.s32.totalorder %s43, 0
        // Predicated region
        $region125: #{tpu_custom_call.1} parent=71 // pred_check
          %p689 = pneg %p688
        $region126: #{tpu_custom_call.1} parent=71 // pred_check_branch
          %691 = sbr.rel (%p689) target = $region128
        $region127: #{tpu_custom_call.1} parent=71 // pred_region
          %v692 = vld [vmem:[%s584] sm:$0xff]
          %v693 = vld [vmem:[%s584 + $0x8] sm:$0xff]
          %v694 = vpack.c.bf16 %v693, %v692
          loop: start=0, step=1, limit=4
          $region129: #{tpu_custom_call.1} parent=127 // loop_pre_header
            _
          $region130: #{tpu_custom_call.1} parent=127 // loop_header
            %s696 = sphi 0, %s700
            %p697 = scmp.ge.s32.totalorder %s696, 4
          $region131: #{tpu_custom_call.1} parent=127 // loop_header_branch
            %699 = sbr.rel (%p697) target = $region135
          $region132: #{tpu_custom_call.1} parent=127 // loop_body
            %s701 = smul.u32 %s696, 4
            %s702 = smul.addr %s701, 4
            %s703 = scalar_lea.vmem [#allocation14], %s702
            %v704 = vld [vmem:[%s703] sm:$0xf]
            %v705 = vld [vmem:[%s703 + $0x4] sm:$0xf]
            %v706 = vld [vmem:[%s703 + $0x8] sm:$0xf]
            %v707 = vld [vmem:[%s703 + $0xc] sm:$0xf]
            %s708 = scalar_lea.vmem [#allocation16], %s696
            %v709 = vld [vmem:[%s708] sm:$0x1]
            %v711 = vlaneseq
            %v712 = vshrl.u32 %v711, 7
            %v713 = vsub.s32 0, %v712
            %v714 = vrot.slane %v709, %v713
            %v720 = vunpack.c.l.b16 %v704
            %v721 = vunpack.c.l.b16 %v705
            %v722 = vunpack.c.l.b16 %v706
            %v723 = vunpack.c.l.b16 %v707
            %v724 = vpack.c.b16 %v721, %v720
            %v725 = vpack.c.b16 %v723, %v722
            %vm728 = vcmask 261120
            %v730 = vsel %vm728, %v694, 0
            %732 = vmatprep.subr.bf16.mxu0 0
            %733 = vmatpush1.bf16.msra.mxu0 %v724
            %734 = vmatprep.subr.bf16.mxu0 0
            %735 = vmatpush1.bf16.msra.mxu0 %v725
            %736 = vmatprep.subr.bf16.mxu0 0
            %737 = vmatpush1.bf16.msra.mxu0 0
            %738 = vmatprep.subr.bf16.mxu0 0
            %739 = vmatpush1.bf16.msra.mxu0 0
            %740 = vmatprep.subr.bf16.mxu0 0
            %741 = vmatpush1.bf16.msra.mxu0 0
            %742 = vmatprep.subr.bf16.mxu0 0
            %743 = vmatpush1.bf16.msra.mxu0 0
            %744 = vmatprep.subr.bf16.mxu0 0
            %745 = vmatpush1.bf16.msra.mxu0 0
            %746 = vmatprep.subr.bf16.mxu0 0
            %747 = vmatpush1.bf16.msra.mxu0 0
            %748 = vmatprep.subr.bf16.mxu0 0
            %749 = vmatpush1.bf16.msra.mxu0 0
            %750 = vmatprep.subr.bf16.mxu0 0
            %751 = vmatpush1.bf16.msra.mxu0 0
            %752 = vmatprep.subr.bf16.mxu0 0
            %753 = vmatpush1.bf16.msra.mxu0 0
            %754 = vmatprep.subr.bf16.mxu0 0
            %755 = vmatpush1.bf16.msra.mxu0 0
            %756 = vmatprep.subr.bf16.mxu0 0
            %757 = vmatpush1.bf16.msra.mxu0 0
            %758 = vmatprep.subr.bf16.mxu0 0
            %759 = vmatpush1.bf16.msra.mxu0 0
            %760 = vmatprep.subr.bf16.mxu0 0
            %761 = vmatpush1.bf16.msra.mxu0 0
            %762 = vmatprep.subr.bf16.mxu0 0
            %763 = vmatpush1.bf16.msra.mxu0 0
            %764 = vmatprep.mubr.bf16.mxu0 0
            %765 = vmatmul.mubr.bf16.gmra.mrb[0].mxu0 %v730
            %v766 = vpop.f32.mrb[0].mxu0
            %v767 = vadd.f32 %v714, %v766
            %v768 = vpop.f32.mrb[0].mxu0
            %v769 = vpop.f32.mrb[0].mxu0
            %v770 = vadd.f32 %v714, %v769
            %v771 = vpop.f32.mrb[0].mxu0
            %772 = vdwg.mxu0
            %s773 = smul.addr %s701, 4
            %s774 = scalar_lea.vmem [#allocation17], %s773
            %v775 = vld [vmem:[%s774] sm:$0xf]
            %v776 = vld [vmem:[%s774 + $0x4] sm:$0xf]
            %v777 = vld [vmem:[%s774 + $0x8] sm:$0xf]
            %v778 = vld [vmem:[%s774 + $0xc] sm:$0xf]
            %s779 = scalar_lea.vmem [#allocation19], %s696
            %v780 = vld [vmem:[%s779] sm:$0x1]
            %v782 = vlaneseq
            %v783 = vshrl.u32 %v782, 7
            %v784 = vsub.s32 0, %v783
            %v785 = vrot.slane %v780, %v784
            %v791 = vunpack.c.l.b16 %v775
            %v792 = vunpack.c.l.b16 %v776
            %v793 = vunpack.c.l.b16 %v777
            %v794 = vunpack.c.l.b16 %v778
            %v795 = vpack.c.b16 %v792, %v791
            %v796 = vpack.c.b16 %v794, %v793
            %799 = vmatprep.subr.bf16.mxu0 0
            %800 = vmatpush1.bf16.msra.mxu0 %v795
            %801 = vmatprep.subr.bf16.mxu0 0
            %802 = vmatpush1.bf16.msra.mxu0 %v796
            %803 = vmatprep.subr.bf16.mxu0 0
            %804 = vmatpush1.bf16.msra.mxu0 0
            %805 = vmatprep.subr.bf16.mxu0 0
            %806 = vmatpush1.bf16.msra.mxu0 0
            %807 = vmatprep.subr.bf16.mxu0 0
            %808 = vmatpush1.bf16.msra.mxu0 0
            %809 = vmatprep.subr.bf16.mxu0 0
            %810 = vmatpush1.bf16.msra.mxu0 0
            %811 = vmatprep.subr.bf16.mxu0 0
            %812 = vmatpush1.bf16.msra.mxu0 0
            %813 = vmatprep.subr.bf16.mxu0 0
            %814 = vmatpush1.bf16.msra.mxu0 0
            %815 = vmatprep.subr.bf16.mxu0 0
            %816 = vmatpush1.bf16.msra.mxu0 0
            %817 = vmatprep.subr.bf16.mxu0 0
            %818 = vmatpush1.bf16.msra.mxu0 0
            %819 = vmatprep.subr.bf16.mxu0 0
            %820 = vmatpush1.bf16.msra.mxu0 0
            %821 = vmatprep.subr.bf16.mxu0 0
            %822 = vmatpush1.bf16.msra.mxu0 0
            %823 = vmatprep.subr.bf16.mxu0 0
            %824 = vmatpush1.bf16.msra.mxu0 0
            %825 = vmatprep.subr.bf16.mxu0 0
            %826 = vmatpush1.bf16.msra.mxu0 0
            %827 = vmatprep.subr.bf16.mxu0 0
            %828 = vmatpush1.bf16.msra.mxu0 0
            %829 = vmatprep.subr.bf16.mxu0 0
            %830 = vmatpush1.bf16.msra.mxu0 0
            %831 = vmatprep.mubr.bf16.mxu0 0
            %832 = vmatmul.mubr.bf16.gmra.mrb[0].mxu0 %v730
            %v833 = vpop.f32.mrb[0].mxu0
            %v834 = vadd.f32 %v785, %v833
            %v835 = vpop.f32.mrb[0].mxu0
            %v836 = vpop.f32.mrb[0].mxu0
            %v837 = vadd.f32 %v785, %v836
            %v838 = vpop.f32.mrb[0].mxu0
            %839 = vdwg.mxu0
            %v840 = vpack.c.bf16 %v770, %v767
            %s841 = smul.addr %s696, 8
            %s842 = scalar_lea.vmem [#allocation2], %s841
            %vm843 = vcmask 64512
            %844 = vst.msk [vmem:[%s842] sm:$0xff] %vm843, %v840
            %v845 = vpack.c.bf16 %v837, %v834
            %s846 = smul.addr %s696, 8
            %s847 = scalar_lea.vmem [#allocation3], %s846
            %848 = vst.msk [vmem:[%s847] sm:$0xff] %vm843, %v845
          $region133: #{tpu_custom_call.1} parent=127 // loop_footer
            %s700 = sadd.s32 1, %s696
          $region134: #{tpu_custom_call.1} parent=127 // loop_footer_branch
            %695 = sbr.rel target = $region130
          $region135: #{tpu_custom_call.1} parent=127 // loop_exit
            _
        $region128: #{tpu_custom_call.1} parent=71 // pred_fallthru
          _
        %vm849 = vcmask 261120
        %850 = vst.msk [vmem:[#allocation4] sm:$0xff] %vm849, 0.0
        loop: start=0, step=1, limit=4
        $region136: #{tpu_custom_call.1} parent=71 // loop_pre_header
          _
        $region137: #{tpu_custom_call.1} parent=71 // loop_header
          %s852 = sphi 0, %s856
          %p853 = scmp.ge.s32.totalorder %s852, 4
        $region138: #{tpu_custom_call.1} parent=71 // loop_header_branch
          %855 = sbr.rel (%p853) target = $region142
        $region139: #{tpu_custom_call.1} parent=71 // loop_body
          %s857 = smul.u32 %s852, 4
          %s858 = smul.addr %s857, 4
          %s859 = scalar_lea.vmem [#allocation11], %s858
          %v860 = vld [vmem:[%s859] sm:$0xf]
          %v861 = vld [vmem:[%s859 + $0x4] sm:$0xf]
          %v862 = vld [vmem:[%s859 + $0x8] sm:$0xf]
          %v863 = vld [vmem:[%s859 + $0xc] sm:$0xf]
          %s864 = scalar_lea.vmem [#allocation13], %s852
          %v865 = vld [vmem:[%s864] sm:$0x1]
          %v867 = vlaneseq
          %v868 = vshrl.u32 %v867, 7
          %v869 = vsub.s32 0, %v868
          %v870 = vrot.slane %v865, %v869
          %v876 = vunpack.c.l.b16 %v860
          %v877 = vunpack.c.l.b16 %v861
          %v878 = vunpack.c.l.b16 %v862
          %v879 = vunpack.c.l.b16 %v863
          %v880 = vpack.c.b16 %v877, %v876
          %v881 = vpack.c.b16 %v879, %v878
          %v885 = vsel %vm849, %v687, 0
          %887 = vmatprep.subr.bf16.mxu0 0
          %888 = vmatpush1.bf16.msra.mxu0 %v880
          %889 = vmatprep.subr.bf16.mxu0 0
          %890 = vmatpush1.bf16.msra.mxu0 %v881
          %891 = vmatprep.subr.bf16.mxu0 0
          %892 = vmatpush1.bf16.msra.mxu0 0
          %893 = vmatprep.subr.bf16.mxu0 0
          %894 = vmatpush1.bf16.msra.mxu0 0
          %895 = vmatprep.subr.bf16.mxu0 0
          %896 = vmatpush1.bf16.msra.mxu0 0
          %897 = vmatprep.subr.bf16.mxu0 0
          %898 = vmatpush1.bf16.msra.mxu0 0
          %899 = vmatprep.subr.bf16.mxu0 0
          %900 = vmatpush1.bf16.msra.mxu0 0
          %901 = vmatprep.subr.bf16.mxu0 0
          %902 = vmatpush1.bf16.msra.mxu0 0
          %903 = vmatprep.subr.bf16.mxu0 0
          %904 = vmatpush1.bf16.msra.mxu0 0
          %905 = vmatprep.subr.bf16.mxu0 0
          %906 = vmatpush1.bf16.msra.mxu0 0
          %907 = vmatprep.subr.bf16.mxu0 0
          %908 = vmatpush1.bf16.msra.mxu0 0
          %909 = vmatprep.subr.bf16.mxu0 0
          %910 = vmatpush1.bf16.msra.mxu0 0
          %911 = vmatprep.subr.bf16.mxu0 0
          %912 = vmatpush1.bf16.msra.mxu0 0
          %913 = vmatprep.subr.bf16.mxu0 0
          %914 = vmatpush1.bf16.msra.mxu0 0
          %915 = vmatprep.subr.bf16.mxu0 0
          %916 = vmatpush1.bf16.msra.mxu0 0
          %917 = vmatprep.subr.bf16.mxu0 0
          %918 = vmatpush1.bf16.msra.mxu0 0
          %919 = vmatprep.mubr.bf16.mxu0 0
          %920 = vmatmul.mubr.bf16.gmra.mrb[0].mxu0 %v885
          %v921 = vpop.f32.mrb[0].mxu0
          %v922 = vadd.f32 %v870, %v921
          %v923 = vpop.f32.mrb[0].mxu0
          %v924 = vpop.f32.mrb[0].mxu0
          %v925 = vpop.f32.mrb[0].mxu0
          %926 = vdwg.mxu0
          %v927 = vpack.c.bf16 %v922, %v922
          %s928 = smul.addr %s852, 8
          %s929 = scalar_lea.vmem [#allocation2], %s928
          %v930 = vld [vmem:[%s929] sm:$0xff]
          %vm931 = vcmask 64512
          %v933 = vsel %vm931, %v927, 0
          %v936 = vsel %vm931, %v930, 0
          %938 = vmatprep.subr.bf16.mxu0 0
          %939 = vmatpush1.bf16.xpose.msra.mxu0 %v936
          %940 = vmatprep.subr.bf16.mxu0 0
          %941 = vmatpush1.bf16.xpose.msra.mxu0 0
          %942 = vmatprep.subr.bf16.mxu0 0
          %943 = vmatpush1.bf16.xpose.msra.mxu0 0
          %944 = vmatprep.subr.bf16.mxu0 0
          %945 = vmatpush1.bf16.xpose.msra.mxu0 0
          %946 = vmatprep.subr.bf16.mxu0 0
          %947 = vmatpush1.bf16.xpose.msra.mxu0 0
          %948 = vmatprep.subr.bf16.mxu0 0
          %949 = vmatpush1.bf16.xpose.msra.mxu0 0
          %950 = vmatprep.subr.bf16.mxu0 0
          %951 = vmatpush1.bf16.xpose.msra.mxu0 0
          %952 = vmatprep.subr.bf16.mxu0 0
          %953 = vmatpush1.bf16.xpose.msra.mxu0 0
          %954 = vmatprep.subr.bf16.mxu0 0
          %955 = vmatpush1.bf16.xpose.msra.mxu0 0
          %956 = vmatprep.subr.bf16.mxu0 0
          %957 = vmatpush1.bf16.xpose.msra.mxu0 0
          %958 = vmatprep.subr.bf16.mxu0 0
          %959 = vmatpush1.bf16.xpose.msra.mxu0 0
          %960 = vmatprep.subr.bf16.mxu0 0
          %961 = vmatpush1.bf16.xpose.msra.mxu0 0
          %962 = vmatprep.subr.bf16.mxu0 0
          %963 = vmatpush1.bf16.xpose.msra.mxu0 0
          %964 = vmatprep.subr.bf16.mxu0 0
          %965 = vmatpush1.bf16.xpose.msra.mxu0 0
          %966 = vmatprep.subr.bf16.mxu0 0
          %967 = vmatpush1.bf16.xpose.msra.mxu0 0
          %968 = vmatprep.subr.bf16.mxu0 0
          %969 = vmatpush1.bf16.xpose.msra.mxu0 0
          %970 = vmatprep.mubr.bf16.mxu0 0
          %971 = vmatmul.mubr.bf16.gmra.mrb[0].mxu0 %v933
          %v972 = vpop.f32.mrb[0].mxu0
          %v973 = vadd.f32 0.0, %v972
          %v974 = vpop.f32.mrb[0].mxu0
          %v975 = vpop.f32.mrb[0].mxu0
          %v976 = vpop.f32.mrb[0].mxu0
          %977 = vdwg.mxu0
          %v978 = vmul.f32 %v973, 0.35355338
          %v980 = vlaneseq
          %v981 = vshrl.u32 %v980, 7
          %v982 = vsub.s32 0, %v981
          %v983 = vrot.slane %v686, %v982
          %v985 = vadd.f32 %v978, %v983
          %vm986 = vcmask 130048
          %v987 = vsel %vm986, %v985, -inf
          %988 = vmax.xlane.f32.xlu0 %v987
          %v989 = vpop.xlane.xlu0 %988
          %v990 = vsub.f32 %v985, %v989
          %v991 = vmul.f32 %v990, 1.442695
          %v992 = vpow.pop %v991
          %v993 = vsel %vm986, %v992, 0.0
          %994 = vadd.xlane.f32.xlu0 %v993
          %v995 = vpop.xlane.xlu0 %994
          %v996 = vrcp.pop %v995
          %v997 = vmul.f32 %v992, %v996
          %v998 = vpack.c.bf16 %v997, %v997
          %s999 = smul.addr %s852, 8
          %s1000 = scalar_lea.vmem [#allocation3], %s999
          %v1001 = vld [vmem:[%s1000] sm:$0xff]
          %v1003 = vsel %vm986, %v998, 0
          %1005 = vmatprep.subr.bf16.mxu0 0
          %1006 = vmatpush1.bf16.msra.mxu0 %v1001
          %1007 = vmatprep.subr.bf16.mxu0 0
          %1008 = vmatpush1.bf16.msra.mxu0 0
          %1009 = vmatprep.subr.bf16.mxu0 0
          %1010 = vmatpush1.bf16.msra.mxu0 0
          %1011 = vmatprep.subr.bf16.mxu0 0
          %1012 = vmatpush1.bf16.msra.mxu0 0
          %1013 = vmatprep.subr.bf16.mxu0 0
          %1014 = vmatpush1.bf16.msra.mxu0 0
          %1015 = vmatprep.subr.bf16.mxu0 0
          %1016 = vmatpush1.bf16.msra.mxu0 0
          %1017 = vmatprep.subr.bf16.mxu0 0
          %1018 = vmatpush1.bf16.msra.mxu0 0
          %1019 = vmatprep.subr.bf16.mxu0 0
          %1020 = vmatpush1.bf16.msra.mxu0 0
          %1021 = vmatprep.subr.bf16.mxu0 0
          %1022 = vmatpush1.bf16.msra.mxu0 0
          %1023 = vmatprep.subr.bf16.mxu0 0
          %1024 = vmatpush1.bf16.msra.mxu0 0
          %1025 = vmatprep.subr.bf16.mxu0 0
          %1026 = vmatpush1.bf16.msra.mxu0 0
          %1027 = vmatprep.subr.bf16.mxu0 0
          %1028 = vmatpush1.bf16.msra.mxu0 0
          %1029 = vmatprep.subr.bf16.mxu0 0
          %1030 = vmatpush1.bf16.msra.mxu0 0
          %1031 = vmatprep.subr.bf16.mxu0 0
          %1032 = vmatpush1.bf16.msra.mxu0 0
          %1033 = vmatprep.subr.bf16.mxu0 0
          %1034 = vmatpush1.bf16.msra.mxu0 0
          %1035 = vmatprep.subr.bf16.mxu0 0
          %1036 = vmatpush1.bf16.msra.mxu0 0
          %1037 = vmatprep.mubr.bf16.mxu0 0
          %1038 = vmatmul.mubr.bf16.gmra.mrb[0].mxu0 %v1003
          %v1039 = vpop.f32.mrb[0].mxu0
          %v1040 = vadd.f32 0.0, %v1039
          %v1041 = vpop.f32.mrb[0].mxu0
          %v1042 = vpop.f32.mrb[0].mxu0
          %v1043 = vpop.f32.mrb[0].mxu0
          %1044 = vdwg.mxu0
          %v1045 = vld [vmem:[#allocation4] sm:$0xff]
          %v1046 = vpack.c.bf16 %v1040, %v1040
          %s1047 = smul.addr %s852, 4
          %s1048 = scalar_lea.vmem [#allocation20], %s1047
          %v1049 = vld [vmem:[%s1048] sm:$0xf]
          %v1051 = vsel %vm931, %v1046, 0
          %vm1053 = vcmask 1043456
          %v1055 = vsel %vm1053, %v1049, 0
          %1057 = vmatprep.subr.bf16.mxu0 0
          %1058 = vmatpush1.bf16.msra.mxu0 %v1055
          %1059 = vmatprep.subr.bf16.mxu0 0
          %1060 = vmatpush1.bf16.msra.mxu0 0
          %1061 = vmatprep.subr.bf16.mxu0 0
          %1062 = vmatpush1.bf16.msra.mxu0 0
          %1063 = vmatprep.subr.bf16.mxu0 0
          %1064 = vmatpush1.bf16.msra.mxu0 0
          %1065 = vmatprep.subr.bf16.mxu0 0
          %1066 = vmatpush1.bf16.msra.mxu0 0
          %1067 = vmatprep.subr.bf16.mxu0 0
          %1068 = vmatpush1.bf16.msra.mxu0 0
          %1069 = vmatprep.subr.bf16.mxu0 0
          %1070 = vmatpush1.bf16.msra.mxu0 0
          %1071 = vmatprep.subr.bf16.mxu0 0
          %1072 = vmatpush1.bf16.msra.mxu0 0
          %1073 = vmatprep.subr.bf16.mxu0 0
          %1074 = vmatpush1.bf16.msra.mxu0 0
          %1075 = vmatprep.subr.bf16.mxu0 0
          %1076 = vmatpush1.bf16.msra.mxu0 0
          %1077 = vmatprep.subr.bf16.mxu0 0
          %1078 = vmatpush1.bf16.msra.mxu0 0
          %1079 = vmatprep.subr.bf16.mxu0 0
          %1080 = vmatpush1.bf16.msra.mxu0 0
          %1081 = vmatprep.subr.bf16.mxu0 0
          %1082 = vmatpush1.bf16.msra.mxu0 0
          %1083 = vmatprep.subr.bf16.mxu0 0
          %1084 = vmatpush1.bf16.msra.mxu0 0
          %1085 = vmatprep.subr.bf16.mxu0 0
          %1086 = vmatpush1.bf16.msra.mxu0 0
          %1087 = vmatprep.subr.bf16.mxu0 0
          %1088 = vmatpush1.bf16.msra.mxu0 0
          %1089 = vmatprep.mubr.bf16.mxu0 0
          %1090 = vmatmul.mubr.bf16.gmra.mrb[0].mxu0 %v1051
          %v1091 = vpop.f32.mrb[0].mxu0
          %v1092 = vadd.f32 0.0, %v1091
          %v1093 = vpop.f32.mrb[0].mxu0
          %v1094 = vpop.f32.mrb[0].mxu0
          %v1095 = vpop.f32.mrb[0].mxu0
          %1096 = vdwg.mxu0
          %v1097 = vadd.f32 %v1045, %v1092
          %1098 = vst.msk [vmem:[#allocation4] sm:$0xff] %vm849, %v1097
        $region140: #{tpu_custom_call.1} parent=71 // loop_footer
          %s856 = sadd.s32 1, %s852
        $region141: #{tpu_custom_call.1} parent=71 // loop_footer_branch
          %851 = sbr.rel target = $region137
        $region142: #{tpu_custom_call.1} parent=71 // loop_exit
          _
        %v1099 = vld [vmem:[#allocation4] sm:$0xff]
        %v1100 = vld [vmem:[#allocation22] sm:$0x1]
        %v1102 = vlaneseq
        %v1103 = vshrl.u32 %v1102, 7
        %v1104 = vsub.s32 0, %v1103
        %v1105 = vrot.slane %v1100, %v1104
        %v1107 = vadd.f32 %v1099, %v1105
        %v1108 = vadd.f32 %v1107, %v685
        %v1109 = vsel %vm849, %v1108, 0.0
        %1110 = vadd.xlane.f32.xlu0 %v1109
        %v1111 = vpop.xlane.xlu0 %1110
        %v1112 = vrcp.pop 32.0
        %v1113 = vmul.f32 %v1111, %v1112
        %v1114 = vsub.f32 %v1108, %v1113
        %v1115 = vmul.f32 %v1114, %v1114
        %v1116 = vsel %vm849, %v1115, 0.0
        %1117 = vadd.xlane.f32.xlu0 %v1116
        %v1118 = vpop.xlane.xlu0 %1117
        %v1119 = vmul.f32 %v1118, %v1112
        %v1120 = vadd.f32 %v1119, 1e-12
        %v1121 = vrsqrt.pop %v1120
        %v1122 = vmul.f32 %v1114, %v1121
        %v1123 = vld [vmem:[#allocation23] sm:$0x1]
        %v1125 = vlaneseq
        %v1126 = vshrl.u32 %v1125, 7
        %v1127 = vsub.s32 0, %v1126
        %v1128 = vrot.slane %v1123, %v1127
        %v1130 = vmul.f32 %v1122, %v1128
        %v1131 = vld [vmem:[#allocation25] sm:$0x1]
        %v1133 = vlaneseq
        %v1134 = vshrl.u32 %v1133, 7
        %v1135 = vsub.s32 0, %v1134
        %v1136 = vrot.slane %v1131, %v1135
        %v1138 = vadd.f32 %v1130, %v1136
        %1139 = vst.msk [vmem:[%s683] sm:$0xff] %vm849, %v1138
        %s1140 = sand.u32 %s350, 1
        %s1141 = scalar_lea.sflag [#allocation7], %s1140
        %s1142 = sand.u32 %s350, 1
        %s1143 = smul.addr %s1142, 8
        %s1144 = scalar_lea.vmem [#allocation26], %s1143
        // Predicated region
        $region143: #{tpu_custom_call.1} parent=71 // pred_check
          %p1145 = pneg %p360
        $region144: #{tpu_custom_call.1} parent=71 // pred_check_branch
          %1147 = sbr.rel (%p1145) target = $region146
        $region145: #{tpu_custom_call.1} parent=71 // pred_region
          %s1149 = ssub.s32 128, 128
          %1150 = vsyncadd %s1141, %s1149
          %s1151 = smul.addr %s42, 2
          %s1152 = sadd.s32 %s43, %s1151
          %s1153 = smul.addr %s1152, 128
          %s1154 = scalar_lea.hbm %s13, %s1153
          %s1156 = sshll.u32 %s1144, 4
          %s1157 = int_to_ptr.vmem [resolvable:$true] %s1156
          %1159 = dma.vmem_to_hbm [thread:$0]  %s1157, 128, %s1154, %s1141
        $region146: #{tpu_custom_call.1} parent=71 // pred_fallthru
          _
      $region72: #{tpu_custom_call.1} parent=5 // pred_fallthru
        _
      %p1160 = scmp.le.s32.totalorder 2, %s33
      // Predicated region
      $region147: #{tpu_custom_call.1} parent=5 // pred_check
        %p1161 = pneg %p1160
      $region148: #{tpu_custom_call.1} parent=5 // pred_check_branch
        %1163 = sbr.rel (%p1161) target = $region150
      $region149: #{tpu_custom_call.1} parent=5 // pred_region
        %s1164 = ssub.s32 %s33, 2
        // Predicated region
        $region151: #{tpu_custom_call.1} parent=149 // pred_check
          %p1165 = pneg %p366
        $region152: #{tpu_custom_call.1} parent=149 // pred_check_branch
          %1167 = sbr.rel (%p1165) target = $region154
        $region153: #{tpu_custom_call.1} parent=149 // pred_region
          %s1168 = sand.u32 %s351, 1
          %s1169 = scalar_lea.sflag [#allocation7], %s1168
          %s1170 = sand.u32 %s351, 1
          %s1171 = smul.addr %s1170, 8
          %s1172 = scalar_lea.vmem [#allocation26], %s1171
          %1173 = dma.done %s1169, 128
        $region154: #{tpu_custom_call.1} parent=149 // pred_fallthru
          _
      $region150: #{tpu_custom_call.1} parent=5 // pred_fallthru
        _
    $region6: #{tpu_custom_call.1} parent=1 // loop_footer
      %s37 = sadd.s32 1, %s33
    $region7: #{tpu_custom_call.1} parent=1 // loop_footer_branch
      %32 = sbr.rel target = $region3
    $region8: #{tpu_custom_call.1} parent=1 // loop_exit
      _
    %1174 = vsyncpa [#allocation6], 1
    %s1175 = scalar_lea.sflag [#allocation6], 1
    %1176 = vsyncpa %s1175, 1
    %1177 = vsyncpa [#allocation9], 1
    %s1178 = scalar_lea.sflag [#allocation9], 1
    %1179 = vsyncpa %s1178, 1
    %1180 = vsyncpa [#allocation12], 1
    %1181 = vsyncpa [#allocation15], 1
    %1182 = vsyncpa [#allocation18], 1
    %1183 = vsyncpa [#allocation21], 1
    %1184 = vsyncpa [#allocation24], 1
    %1185 = vsyncpa [#allocation7], 1
    %s1186 = scalar_lea.sflag [#allocation7], 1
    %1187 = vsyncpa %s1186, 1

</llo_original>
